<compile_context>
chip_gen: v7x
topology: tpu7x:2x2x1
jax: 0.10.0
libtpu: 0.0.40
codegen_flags: <defaults>
</compile_context>

<pallas_src>
import numpy as np
import jax
import jax.numpy as jnp
from jax.experimental import pallas as pl
from jax.experimental.pallas import tpu as pltpu


# ----------------------------- Pallas kernel --------------------------------
def _make_kernel(W, HWp, Nb):
    def kernel(x_ref, w1_ref, w3_ref, wb_ref, m_ref, o_ref):
        w1 = w1_ref[...]                               # (Cp, Cp) bf16, BN1 folded
        w3 = w3_ref[...]                               # (Cp, Cp) bf16, BN3 folded
        wb = wb_ref[...]                               # (Cp, 16) f32: 9 dw taps | b1 b2 b3
        m = m_ref[...]                                 # (4, HWp) f32 separable masks
        tap = [wb[:, j:j + 1] for j in range(9)]       # per-channel depthwise taps
        b1, b2, b3 = wb[:, 9:10], wb[:, 10:11], wb[:, 11:12]
        cm_l, cm_r = m[0:1, :], m[1:2, :]              # column masks (dw = -1 / +1)
        rm_u, rm_d = m[2:3, :], m[3:4, :]              # row masks    (dh = -1 / +1)

        # Static unroll over the images in this block: w1/w3 stay MXU-resident
        # across the back-to-back matmuls.
        for n in range(Nb):
            x = x_ref[n]                               # (Cp, HWp) bf16

            # --- conv1 (1x1, BN folded) + bias + relu -----------------------
            t = jnp.dot(w1, x, preferred_element_type=jnp.float32)
            t = jnp.maximum(t + b1, 0.0)               # (Cp, HWp) f32

            # --- conv2: depthwise 3x3, stride 1, pad 1 ----------------------
            # Separable boundary masks: the two column-masked horizontal
            # shifts are shared by all three row groups; each row group is
            # then row-rolled and row-masked.  4 rolls total (was 8).
            tl = cm_l * pltpu.roll(t, shift=1, axis=1)          # t[p-1]
            tr = cm_r * pltpu.roll(t, shift=HWp - 1, axis=1)    # t[p+1]

            def row_sum(dh):
                k = 3 * (dh + 1)
                return tap[k] * tl + tap[k + 1] * t + tap[k + 2] * tr

            acc = row_sum(0)
            acc = acc + rm_u * pltpu.roll(row_sum(-1), shift=W, axis=1)        # row above
            acc = acc + rm_d * pltpu.roll(row_sum(1), shift=HWp - W, axis=1)   # row below
            t2 = jnp.maximum(acc + b2, 0.0)

            # --- conv3 (1x1, folded) + bias + residual + relu, bf16 store ---
            y = jnp.dot(w3, t2.astype(jnp.bfloat16),
                        preferred_element_type=jnp.float32)
            y = jnp.maximum(y + b3 + x.astype(jnp.float32), 0.0)
            o_ref[n] = y.astype(o_ref.dtype)

    return kernel


# ------------------------------ host-side glue ------------------------------
def _sep_masks(H, W, HWp):
    """(4, HWp) separable boundary masks; zero over the HW pad lanes."""
    HW = H * W
    hh = np.arange(HW) // W
    ww = np.arange(HW) % W
    m = np.zeros((4, HWp), np.float32)
    m[0, :HW] = ww > 0          # left neighbour in bounds  (dw = -1)
    m[1, :HW] = ww < W - 1      # right neighbour in bounds (dw = +1)
    m[2, :HW] = hh > 0          # row above in bounds       (dh = -1)
    m[3, :HW] = hh < H - 1      # row below in bounds       (dh = +1)
    return jnp.asarray(m)


def init_params(key, inplanes, planes):
    width = planes  # expansion = 1
    ks = jax.random.split(key, 12)
    p = {
        "w1": jax.random.normal(ks[0], (width, inplanes), jnp.float32) * 0.3,
        # depthwise conv2 weight: PyTorch shape (width, 1, 3, 3), squeezed
        "w2": jax.random.normal(ks[1], (width, 3, 3), jnp.float32) * 0.3,
        "w3": jax.random.normal(ks[2], (planes, width), jnp.float32) * 0.3,
    }
    for i, (tag, c) in enumerate((("1", width), ("2", width), ("3", planes))):
        p[f"bn{tag}_gamma"] = jax.random.uniform(ks[3 + 3 * i], (c,), jnp.float32,
                                                 minval=0.5, maxval=1.5)
        p[f"bn{tag}_beta"] = jax.random.normal(ks[4 + 3 * i], (c,), jnp.float32) * 0.1
        p[f"bn{tag}_mean"] = jax.random.normal(ks[5 + 3 * i], (c,), jnp.float32) * 0.1
        p[f"bn{tag}_var"] = 1.0 + 0.1 * jnp.arange(c, dtype=jnp.float32)
    return p


def bottleneck_forward(x_nchw, params, eps=1e-5):
    N, Cin, H, W = x_nchw.shape
    width = params["w1"].shape[0]
    planes = params["w3"].shape[0]
    # Residual add requires a valid identity path (stride=1, no downsample).
    assert Cin == planes, "downsample branch not implemented (inplanes != planes)"

    HW = H * W
    HWp = ((HW + 127) // 128) * 128                     # lane-dense stores / rolls
    Cmax = max(Cin, width, planes)
    # bf16 min tile is (16,128): %16 for sublane packing; at realistic widths
    # round to 128 so the (Cp,Cp)@(Cp,HWp) matmuls feed full MXU tiles.
    Cp = ((Cmax + 15) // 16) * 16 if Cmax <= 128 else ((Cmax + 127) // 128) * 128

    def pad_to(a, axis, size):
        pads = [(0, 0)] * a.ndim
        pads[axis] = (0, size - a.shape[axis])
        return jnp.pad(a, pads)

    # NCHW -> (N, Cp, HWp): free reshape + cheap zero pads, no transpose.
    x2d = pad_to(pad_to(x_nchw.reshape(N, Cin, HW), 2, HWp), 1, Cp).astype(jnp.bfloat16)

    def fold_bn(tag):
        s = params[f"bn{tag}_gamma"] / jnp.sqrt(params[f"bn{tag}_var"] + eps)
        b = params[f"bn{tag}_beta"] - params[f"bn{tag}_mean"] * s
        return s, b

    s1, b1 = fold_bn("1")
    s2, b2 = fold_bn("2")
    s3, b3 = fold_bn("3")

    # Fold BN scales into the conv weights (bf16 MXU operands).
    w1f = pad_to(pad_to(params["w1"] * s1[:, None], 0, Cp), 1, Cp).astype(jnp.bfloat16)
    w3f = pad_to(pad_to(params["w3"] * s3[:, None], 0, Cp), 1, Cp).astype(jnp.bfloat16)

    # One compact (Cp, 16) f32 tile: 9 folded depthwise taps + the 3 BN biases
    # (instead of twelve lane-padded (Cp,1) tiles -> ~9x less constant VMEM/DMA).
    wb = jnp.zeros((Cp, 16), jnp.float32)
    wb = wb.at[:width, 0:9].set(params["w2"].reshape(width, 9) * s2[:, None])
    wb = wb.at[:width, 9].set(b1)
    wb = wb.at[:width, 10].set(b2)
    wb = wb.at[:planes, 11].set(b3)

    masks = _sep_masks(H, W, HWp)                       # (4, HWp) f32

    # Images per grid step: amortize the ~0.35us/step overhead when blocks are
    # tiny, but keep >= 2 grid steps so both v7x TensorCores get work.
    per_image = Cp * HWp * (2 + 2 + 8 * 4)              # x + out blocks + f32 temporaries
    Nb = 1
    for cand in range(N, 0, -1):
        if N % cand:
            continue
        if cand * per_image > 4 * 2**20:
            continue
        if N >= 2 and N // cand < 2:
            continue
        Nb = cand
        break

    # Explicit scoped-VMEM budget (v5e default is only 16 MiB), with headroom.
    vmem_est = (2 * (2 * Nb * Cp * HWp * 2)                       # x + out, double-buffered
                + 2 * (2 * Cp * Cp * 2 + Cp * 128 * 4 + 8 * HWp * 4)  # constants
                + Nb * 8 * Cp * HWp * 4)                          # f32 temporaries
    vmem_limit = int(min(64 * 2**20, max(32 * 2**20, 2 * vmem_est)))

    kernel = _make_kernel(W, HWp, Nb)

    def call(buffer_consts):
        def const(shape):
            if buffer_consts:
                # Grid-invariant constants: single buffer, free the VMEM for data.
                return pl.BlockSpec(shape, lambda i: (0,) * len(shape),
                                    pipeline_mode=pl.Buffered(1))
            return pl.BlockSpec(shape, lambda i: (0,) * len(shape))

        return pl.pallas_call(
            kernel,
            out_shape=jax.ShapeDtypeStruct((N, Cp, HWp), jnp.bfloat16),
            grid_spec=pltpu.PrefetchScalarGridSpec(
                num_scalar_prefetch=0,
                grid=(N // Nb,),
                in_specs=[
                    pl.BlockSpec((Nb, Cp, HWp), lambda i: (i, 0, 0)),   # x
                    const((Cp, Cp)),                                    # w1 (BN folded)
                    const((Cp, Cp)),                                    # w3 (BN folded)
                    const((Cp, 16)),                                    # taps + biases
                    const((4, HWp)),                                    # separable masks
                ],
                out_specs=pl.BlockSpec((Nb, Cp, HWp), lambda i: (i, 0, 0)),
            ),
            compiler_params=pltpu.CompilerParams(
                dimension_semantics=("parallel",),
                vmem_limit_bytes=vmem_limit),
        )(x2d, w1f, w3f, wb, masks)

    try:
        out = call(True)
    except Exception:
        # pipeline_mode / Buffered(1) unsupported on this jax/libtpu: fall back
        # to default double-buffered constants (correctness identical).
        out = call(False)

    # (N, Cp, HWp) -> NCHW: drop channel/lane padding, reshape only.  Output is
    # bf16 (halves HBM writeback); cast on the host if f32 is needed downstream.
    return out[:, :planes, :HW].reshape(N, planes, H, W)


# ---------------------------- pure-JAX reference ----------------------------
def ref_forward(x, p, eps=1e-5):
    N, C, H, W = x.shape

    def bn(y, tag):
        s = p[f"bn{tag}_gamma"] / jnp.sqrt(p[f"bn{tag}_var"] + eps)
        b = p[f"bn{tag}_beta"] - p[f"bn{tag}_mean"] * s
        return y * s[None, :, None, None] + b[None, :, None, None]

    y = jnp.einsum("nchw,oc->nohw", x, p["w1"])
    y = jnp.maximum(bn(y, "1"), 0.0)
    yp = jnp.pad(y, ((0, 0), (0, 0), (1, 1), (1, 1)))
    z = jnp.zeros_like(y)
    for kh in range(3):
        for kw in range(3):
            z = z + yp[:, :, kh:kh + H, kw:kw + W] * p["w2"][None, :, kh, kw, None, None]
    z = jnp.maximum(bn(z, "2"), 0.0)
    o = jnp.einsum("nchw,oc->nohw", z, p["w3"])
    o = bn(o, "3")
    return jnp.maximum(o + x, 0.0)


if __name__ == "__main__":
    key = jax.random.PRNGKey(0)
    kx, kp = jax.random.split(key)

    N, C, H, W = 2, 4, 16, 16           # inplanes == planes == 4, spatial 16x16
    x = jax.random.normal(kx, (N, C, H, W), jnp.float32)
    params = init_params(kp, inplanes=C, planes=C)

    out = jax.block_until_ready(bottleneck_forward(x, params))
    ref = jax.block_until_ready(ref_forward(x, params))

    assert out.shape == x.shape, (out.shape, x.shape)
    max_err = float(jnp.max(jnp.abs(out.astype(jnp.float32) - ref)))
    # bf16 MXU operands + bf16 output, f32 accumulation: allow bf16-level error.
    assert max_err < 1e-1, f"max abs error {max_err}"

    print("KERNEL_OK")
</pallas_src>

<mosaic_0001>
module attributes {stable_mosaic.version = 11 : i64} {
  func.func @kernel(%arg0: i32, %arg1: memref<1x16x256xbf16, #tpu.memory_space<vmem>>, %arg2: memref<16x16xbf16, #tpu.memory_space<vmem>>, %arg3: memref<16x16xbf16, #tpu.memory_space<vmem>>, %arg4: memref<16x16xf32, #tpu.memory_space<vmem>>, %arg5: memref<4x256xf32, #tpu.memory_space<vmem>>, %arg6: memref<1x16x256xbf16, #tpu.memory_space<vmem>>) attributes {dimension_semantics = [#tpu.dimension_semantics<parallel>], iteration_bounds = array<i64: 2>, scalar_prefetch = 0 : i64, scratch_operands = 0 : i64, tpu.core_type = #tpu.core_type<tc>, window_params = [{transform_indices = @transform_0, window_bounds = array<i64: 1, 16, 256>}, {pipeline_mode = #tpu.pipeline_mode<synchronous>, transform_indices = @transform_1, window_bounds = array<i64: 16, 16>}, {pipeline_mode = #tpu.pipeline_mode<synchronous>, transform_indices = @transform_2, window_bounds = array<i64: 16, 16>}, {pipeline_mode = #tpu.pipeline_mode<synchronous>, transform_indices = @transform_3, window_bounds = array<i64: 16, 16>}, {pipeline_mode = #tpu.pipeline_mode<synchronous>, transform_indices = @transform_4, window_bounds = array<i64: 4, 256>}, {transform_indices = @transform_5, window_bounds = array<i64: 1, 16, 256>}]} {
    %c0 = arith.constant 0 : index
    %c0_0 = arith.constant 0 : index
    %0 = vector.load %arg2[%c0, %c0_0] : memref<16x16xbf16, #tpu.memory_space<vmem>>, vector<16x16xbf16>
    %c0_1 = arith.constant 0 : index
    %c0_2 = arith.constant 0 : index
    %1 = vector.load %arg3[%c0_1, %c0_2] : memref<16x16xbf16, #tpu.memory_space<vmem>>, vector<16x16xbf16>
    %c0_3 = arith.constant 0 : index
    %c0_4 = arith.constant 0 : index
    %2 = vector.load %arg4[%c0_3, %c0_4] : memref<16x16xf32, #tpu.memory_space<vmem>>, vector<16x16xf32>
    %c0_5 = arith.constant 0 : index
    %c0_6 = arith.constant 0 : index
    %3 = vector.load %arg5[%c0_5, %c0_6] : memref<4x256xf32, #tpu.memory_space<vmem>>, vector<4x256xf32>
    %4 = vector.extract_strided_slice %2 {offsets = [0, 0], sizes = [16, 1], strides = [1, 1]} : vector<16x16xf32> to vector<16x1xf32>
    %5 = vector.extract_strided_slice %2 {offsets = [0, 1], sizes = [16, 1], strides = [1, 1]} : vector<16x16xf32> to vector<16x1xf32>
    %6 = vector.extract_strided_slice %2 {offsets = [0, 2], sizes = [16, 1], strides = [1, 1]} : vector<16x16xf32> to vector<16x1xf32>
    %7 = vector.extract_strided_slice %2 {offsets = [0, 3], sizes = [16, 1], strides = [1, 1]} : vector<16x16xf32> to vector<16x1xf32>
    %8 = vector.extract_strided_slice %2 {offsets = [0, 4], sizes = [16, 1], strides = [1, 1]} : vector<16x16xf32> to vector<16x1xf32>
    %9 = vector.extract_strided_slice %2 {offsets = [0, 5], sizes = [16, 1], strides = [1, 1]} : vector<16x16xf32> to vector<16x1xf32>
    %10 = vector.extract_strided_slice %2 {offsets = [0, 6], sizes = [16, 1], strides = [1, 1]} : vector<16x16xf32> to vector<16x1xf32>
    %11 = vector.extract_strided_slice %2 {offsets = [0, 7], sizes = [16, 1], strides = [1, 1]} : vector<16x16xf32> to vector<16x1xf32>
    %12 = vector.extract_strided_slice %2 {offsets = [0, 8], sizes = [16, 1], strides = [1, 1]} : vector<16x16xf32> to vector<16x1xf32>
    %13 = vector.extract_strided_slice %2 {offsets = [0, 9], sizes = [16, 1], strides = [1, 1]} : vector<16x16xf32> to vector<16x1xf32>
    %14 = vector.extract_strided_slice %2 {offsets = [0, 10], sizes = [16, 1], strides = [1, 1]} : vector<16x16xf32> to vector<16x1xf32>
    %15 = vector.extract_strided_slice %2 {offsets = [0, 11], sizes = [16, 1], strides = [1, 1]} : vector<16x16xf32> to vector<16x1xf32>
    %16 = vector.extract_strided_slice %3 {offsets = [0, 0], sizes = [1, 256], strides = [1, 1]} : vector<4x256xf32> to vector<1x256xf32>
    %17 = vector.extract_strided_slice %3 {offsets = [1, 0], sizes = [1, 256], strides = [1, 1]} : vector<4x256xf32> to vector<1x256xf32>
    %18 = vector.extract_strided_slice %3 {offsets = [2, 0], sizes = [1, 256], strides = [1, 1]} : vector<4x256xf32> to vector<1x256xf32>
    %19 = vector.extract_strided_slice %3 {offsets = [3, 0], sizes = [1, 256], strides = [1, 1]} : vector<4x256xf32> to vector<1x256xf32>
    %c0_7 = arith.constant 0 : index
    %c0_8 = arith.constant 0 : index
    %c0_9 = arith.constant 0 : index
    %20 = vector.load %arg1[%c0_7, %c0_8, %c0_9] : memref<1x16x256xbf16, #tpu.memory_space<vmem>>, vector<1x16x256xbf16>
    %21 = vector.shape_cast %20 : vector<1x16x256xbf16> to vector<16x256xbf16>
    %cst = arith.constant dense<0.000000e+00> : vector<16x256xf32>
    %22 = tpu.matmul %0, %21, %cst {dimension_numbers = #tpu.dot_dimension_numbers<[1], [0], [0], [1], [0, 0, 1, 1], [], []>} : vector<16x16xbf16>, vector<16x256xbf16>, vector<16x256xf32> -> vector<16x256xf32>
    %23 = vector.broadcast %13 : vector<16x1xf32> to vector<16x256xf32>
    %24 = arith.addf %22, %23 : vector<16x256xf32>
    %cst_10 = arith.constant 0.000000e+00 : f32
    %25 = vector.broadcast %cst_10 : f32 to vector<16x256xf32>
    %26 = arith.maximumf %24, %25 : vector<16x256xf32>
    %c1_i32 = arith.constant 1 : i32
    %27 = tpu.dynamic_rotate %26 by %c1_i32 dim 1 : vector<16x256xf32>, i32 -> vector<16x256xf32>
    %28 = vector.broadcast %16 : vector<1x256xf32> to vector<16x256xf32>
    %29 = arith.mulf %28, %27 : vector<16x256xf32>
    %c255_i32 = arith.constant 255 : i32
    %30 = tpu.dynamic_rotate %26 by %c255_i32 dim 1 : vector<16x256xf32>, i32 -> vector<16x256xf32>
    %31 = vector.broadcast %17 : vector<1x256xf32> to vector<16x256xf32>
    %32 = arith.mulf %31, %30 : vector<16x256xf32>
    %33 = vector.broadcast %7 : vector<16x1xf32> to vector<16x256xf32>
    %34 = arith.mulf %33, %29 : vector<16x256xf32>
    %35 = vector.broadcast %8 : vector<16x1xf32> to vector<16x256xf32>
    %36 = arith.mulf %35, %26 : vector<16x256xf32>
    %37 = arith.addf %34, %36 : vector<16x256xf32>
    %38 = vector.broadcast %9 : vector<16x1xf32> to vector<16x256xf32>
    %39 = arith.mulf %38, %32 : vector<16x256xf32>
    %40 = arith.addf %37, %39 : vector<16x256xf32>
    %41 = vector.broadcast %4 : vector<16x1xf32> to vector<16x256xf32>
    %42 = arith.mulf %41, %29 : vector<16x256xf32>
    %43 = vector.broadcast %5 : vector<16x1xf32> to vector<16x256xf32>
    %44 = arith.mulf %43, %26 : vector<16x256xf32>
    %45 = arith.addf %42, %44 : vector<16x256xf32>
    %46 = vector.broadcast %6 : vector<16x1xf32> to vector<16x256xf32>
    %47 = arith.mulf %46, %32 : vector<16x256xf32>
    %48 = arith.addf %45, %47 : vector<16x256xf32>
    %c16_i32 = arith.constant 16 : i32
    %49 = tpu.dynamic_rotate %48 by %c16_i32 dim 1 : vector<16x256xf32>, i32 -> vector<16x256xf32>
    %50 = vector.broadcast %18 : vector<1x256xf32> to vector<16x256xf32>
    %51 = arith.mulf %50, %49 : vector<16x256xf32>
    %52 = arith.addf %40, %51 : vector<16x256xf32>
    %53 = vector.broadcast %10 : vector<16x1xf32> to vector<16x256xf32>
    %54 = arith.mulf %53, %29 : vector<16x256xf32>
    %55 = vector.broadcast %11 : vector<16x1xf32> to vector<16x256xf32>
    %56 = arith.mulf %55, %26 : vector<16x256xf32>
    %57 = arith.addf %54, %56 : vector<16x256xf32>
    %58 = vector.broadcast %12 : vector<16x1xf32> to vector<16x256xf32>
    %59 = arith.mulf %58, %32 : vector<16x256xf32>
    %60 = arith.addf %57, %59 : vector<16x256xf32>
    %c240_i32 = arith.constant 240 : i32
    %61 = tpu.dynamic_rotate %60 by %c240_i32 dim 1 : vector<16x256xf32>, i32 -> vector<16x256xf32>
    %62 = vector.broadcast %19 : vector<1x256xf32> to vector<16x256xf32>
    %63 = arith.mulf %62, %61 : vector<16x256xf32>
    %64 = arith.addf %52, %63 : vector<16x256xf32>
    %65 = vector.broadcast %14 : vector<16x1xf32> to vector<16x256xf32>
    %66 = arith.addf %64, %65 : vector<16x256xf32>
    %cst_11 = arith.constant 0.000000e+00 : f32
    %67 = vector.broadcast %cst_11 : f32 to vector<16x256xf32>
    %68 = arith.maximumf %66, %67 : vector<16x256xf32>
    %69 = arith.truncf %68 : vector<16x256xf32> to vector<16x256xbf16>
    %cst_12 = arith.constant dense<0.000000e+00> : vector<16x256xf32>
    %70 = tpu.matmul %1, %69, %cst_12 {dimension_numbers = #tpu.dot_dimension_numbers<[1], [0], [0], [1], [0, 0, 1, 1], [], []>} : vector<16x16xbf16>, vector<16x256xbf16>, vector<16x256xf32> -> vector<16x256xf32>
    %71 = vector.broadcast %15 : vector<16x1xf32> to vector<16x256xf32>
    %72 = arith.addf %70, %71 : vector<16x256xf32>
    %73 = arith.extf %21 : vector<16x256xbf16> to vector<16x256xf32>
    %74 = arith.addf %72, %73 : vector<16x256xf32>
    %cst_13 = arith.constant 0.000000e+00 : f32
    %75 = vector.broadcast %cst_13 : f32 to vector<16x256xf32>
    %76 = arith.maximumf %74, %75 : vector<16x256xf32>
    %77 = arith.truncf %76 : vector<16x256xf32> to vector<16x256xbf16>
    %c0_14 = arith.constant 0 : index
    %c0_15 = arith.constant 0 : index
    %c0_16 = arith.constant 0 : index
    %78 = vector.load %arg6[%c0_14, %c0_15, %c0_16] : memref<1x16x256xbf16, #tpu.memory_space<vmem>>, vector<1x16x256xbf16>
    %79 = vector.shape_cast %78 : vector<1x16x256xbf16> to vector<16x256xbf16>
    %80 = vector.shape_cast %77 : vector<16x256xbf16> to vector<1x16x256xbf16>
    tpu.vector_store %arg6[%c0_14, %c0_15, %c0_16], %80 {strides = array<i32>} : memref<1x16x256xbf16, #tpu.memory_space<vmem>>, vector<1x16x256xbf16>,
    return
  }
  func.func @transform_0(%arg0: i32) -> (i32, i32, i32) {
    %c0_i32 = arith.constant 0 : i32
    %c0_i32_0 = arith.constant 0 : i32
    %c0_i32_1 = arith.constant 0 : i32
    return %arg0, %c0_i32, %c0_i32_0 : i32, i32, i32
  }
  func.func @transform_1(%arg0: i32) -> (i32, i32) {
    %c0_i32 = arith.constant 0 : i32
    %c0_i32_0 = arith.constant 0 : i32
    %c0_i32_1 = arith.constant 0 : i32
    return %c0_i32, %c0_i32_0 : i32, i32
  }
  func.func @transform_2(%arg0: i32) -> (i32, i32) {
    %c0_i32 = arith.constant 0 : i32
    %c0_i32_0 = arith.constant 0 : i32
    %c0_i32_1 = arith.constant 0 : i32
    return %c0_i32, %c0_i32_0 : i32, i32
  }
  func.func @transform_3(%arg0: i32) -> (i32, i32) {
    %c0_i32 = arith.constant 0 : i32
    %c0_i32_0 = arith.constant 0 : i32
    %c0_i32_1 = arith.constant 0 : i32
    return %c0_i32, %c0_i32_0 : i32, i32
  }
  func.func @transform_4(%arg0: i32) -> (i32, i32) {
    %c0_i32 = arith.constant 0 : i32
    %c0_i32_0 = arith.constant 0 : i32
    %c0_i32_1 = arith.constant 0 : i32
    return %c0_i32, %c0_i32_0 : i32, i32
  }
  func.func @transform_5(%arg0: i32) -> (i32, i32, i32) {
    %c0_i32 = arith.constant 0 : i32
    %c0_i32_0 = arith.constant 0 : i32
    %c0_i32_1 = arith.constant 0 : i32
    return %arg0, %c0_i32, %c0_i32_0 : i32, i32, i32
  }
}

module attributes {stable_mosaic.version = 11 : i64} {
  func.func @kernel(%arg0: i32, %arg1: memref<1x16x256xbf16, #tpu.memory_space<vmem>>, %arg2: memref<16x16xbf16, #tpu.memory_space<vmem>>, %arg3: memref<16x16xbf16, #tpu.memory_space<vmem>>, %arg4: memref<16x16xf32, #tpu.memory_space<vmem>>, %arg5: memref<4x256xf32, #tpu.memory_space<vmem>>, %arg6: memref<1x16x256xbf16, #tpu.memory_space<vmem>>) attributes {dimension_semantics = [#tpu.dimension_semantics<parallel>], iteration_bounds = array<i64: 2>, scalar_prefetch = 0 : i64, scratch_operands = 0 : i64, tpu.core_type = #tpu.core_type<tc>, window_params = [{transform_indices = @transform_0, window_bounds = array<i64: 1, 16, 256>}, {pipeline_mode = #tpu.pipeline_mode<synchronous>, transform_indices = @transform_1, window_bounds = array<i64: 16, 16>}, {pipeline_mode = #tpu.pipeline_mode<synchronous>, transform_indices = @transform_2, window_bounds = array<i64: 16, 16>}, {pipeline_mode = #tpu.pipeline_mode<synchronous>, transform_indices = @transform_3, window_bounds = array<i64: 16, 16>}, {pipeline_mode = #tpu.pipeline_mode<synchronous>, transform_indices = @transform_4, window_bounds = array<i64: 4, 256>}, {transform_indices = @transform_5, window_bounds = array<i64: 1, 16, 256>}]} {
    %c0 = arith.constant 0 : index
    %c0_0 = arith.constant 0 : index
    %0 = vector.load %arg2[%c0, %c0_0] : memref<16x16xbf16, #tpu.memory_space<vmem>>, vector<16x16xbf16>
    %c0_1 = arith.constant 0 : index
    %c0_2 = arith.constant 0 : index
    %1 = vector.load %arg3[%c0_1, %c0_2] : memref<16x16xbf16, #tpu.memory_space<vmem>>, vector<16x16xbf16>
    %c0_3 = arith.constant 0 : index
    %c0_4 = arith.constant 0 : index
    %2 = vector.load %arg4[%c0_3, %c0_4] : memref<16x16xf32, #tpu.memory_space<vmem>>, vector<16x16xf32>
    %c0_5 = arith.constant 0 : index
    %c0_6 = arith.constant 0 : index
    %3 = vector.load %arg5[%c0_5, %c0_6] : memref<4x256xf32, #tpu.memory_space<vmem>>, vector<4x256xf32>
    %4 = vector.extract_strided_slice %2 {offsets = [0, 0], sizes = [16, 1], strides = [1, 1]} : vector<16x16xf32> to vector<16x1xf32>
    %5 = vector.extract_strided_slice %2 {offsets = [0, 1], sizes = [16, 1], strides = [1, 1]} : vector<16x16xf32> to vector<16x1xf32>
    %6 = vector.extract_strided_slice %2 {offsets = [0, 2], sizes = [16, 1], strides = [1, 1]} : vector<16x16xf32> to vector<16x1xf32>
    %7 = vector.extract_strided_slice %2 {offsets = [0, 3], sizes = [16, 1], strides = [1, 1]} : vector<16x16xf32> to vector<16x1xf32>
    %8 = vector.extract_strided_slice %2 {offsets = [0, 4], sizes = [16, 1], strides = [1, 1]} : vector<16x16xf32> to vector<16x1xf32>
    %9 = vector.extract_strided_slice %2 {offsets = [0, 5], sizes = [16, 1], strides = [1, 1]} : vector<16x16xf32> to vector<16x1xf32>
    %10 = vector.extract_strided_slice %2 {offsets = [0, 6], sizes = [16, 1], strides = [1, 1]} : vector<16x16xf32> to vector<16x1xf32>
    %11 = vector.extract_strided_slice %2 {offsets = [0, 7], sizes = [16, 1], strides = [1, 1]} : vector<16x16xf32> to vector<16x1xf32>
    %12 = vector.extract_strided_slice %2 {offsets = [0, 8], sizes = [16, 1], strides = [1, 1]} : vector<16x16xf32> to vector<16x1xf32>
    %13 = vector.extract_strided_slice %2 {offsets = [0, 9], sizes = [16, 1], strides = [1, 1]} : vector<16x16xf32> to vector<16x1xf32>
    %14 = vector.extract_strided_slice %2 {offsets = [0, 10], sizes = [16, 1], strides = [1, 1]} : vector<16x16xf32> to vector<16x1xf32>
    %15 = vector.extract_strided_slice %2 {offsets = [0, 11], sizes = [16, 1], strides = [1, 1]} : vector<16x16xf32> to vector<16x1xf32>
    %16 = vector.extract_strided_slice %3 {offsets = [0, 0], sizes = [1, 256], strides = [1, 1]} : vector<4x256xf32> to vector<1x256xf32>
    %17 = vector.extract_strided_slice %3 {offsets = [1, 0], sizes = [1, 256], strides = [1, 1]} : vector<4x256xf32> to vector<1x256xf32>
    %18 = vector.extract_strided_slice %3 {offsets = [2, 0], sizes = [1, 256], strides = [1, 1]} : vector<4x256xf32> to vector<1x256xf32>
    %19 = vector.extract_strided_slice %3 {offsets = [3, 0], sizes = [1, 256], strides = [1, 1]} : vector<4x256xf32> to vector<1x256xf32>
    %c0_7 = arith.constant 0 : index
    %c0_8 = arith.constant 0 : index
    %c0_9 = arith.constant 0 : index
    %20 = vector.load %arg1[%c0_7, %c0_8, %c0_9] : memref<1x16x256xbf16, #tpu.memory_space<vmem>>, vector<1x16x256xbf16>
    %21 = vector.shape_cast %20 : vector<1x16x256xbf16> to vector<16x256xbf16>
    %cst = arith.constant dense<0.000000e+00> : vector<16x256xf32>
    %22 = tpu.matmul %0, %21, %cst {dimension_numbers = #tpu.dot_dimension_numbers<[1], [0], [0], [1], [0, 0, 1, 1], [], []>} : vector<16x16xbf16>, vector<16x256xbf16>, vector<16x256xf32> -> vector<16x256xf32>
    %23 = vector.broadcast %13 : vector<16x1xf32> to vector<16x256xf32>
    %24 = arith.addf %22, %23 : vector<16x256xf32>
    %cst_10 = arith.constant 0.000000e+00 : f32
    %25 = vector.broadcast %cst_10 : f32 to vector<16x256xf32>
    %26 = arith.maximumf %24, %25 : vector<16x256xf32>
    %c1_i32 = arith.constant 1 : i32
    %27 = tpu.dynamic_rotate %26 by %c1_i32 dim 1 : vector<16x256xf32>, i32 -> vector<16x256xf32>
    %28 = vector.broadcast %16 : vector<1x256xf32> to vector<16x256xf32>
    %29 = arith.mulf %28, %27 : vector<16x256xf32>
    %c255_i32 = arith.constant 255 : i32
    %30 = tpu.dynamic_rotate %26 by %c255_i32 dim 1 : vector<16x256xf32>, i32 -> vector<16x256xf32>
    %31 = vector.broadcast %17 : vector<1x256xf32> to vector<16x256xf32>
    %32 = arith.mulf %31, %30 : vector<16x256xf32>
    %33 = vector.broadcast %7 : vector<16x1xf32> to vector<16x256xf32>
    %34 = arith.mulf %33, %29 : vector<16x256xf32>
    %35 = vector.broadcast %8 : vector<16x1xf32> to vector<16x256xf32>
    %36 = arith.mulf %35, %26 : vector<16x256xf32>
    %37 = arith.addf %34, %36 : vector<16x256xf32>
    %38 = vector.broadcast %9 : vector<16x1xf32> to vector<16x256xf32>
    %39 = arith.mulf %38, %32 : vector<16x256xf32>
    %40 = arith.addf %37, %39 : vector<16x256xf32>
    %41 = vector.broadcast %4 : vector<16x1xf32> to vector<16x256xf32>
    %42 = arith.mulf %41, %29 : vector<16x256xf32>
    %43 = vector.broadcast %5 : vector<16x1xf32> to vector<16x256xf32>
    %44 = arith.mulf %43, %26 : vector<16x256xf32>
    %45 = arith.addf %42, %44 : vector<16x256xf32>
    %46 = vector.broadcast %6 : vector<16x1xf32> to vector<16x256xf32>
    %47 = arith.mulf %46, %32 : vector<16x256xf32>
    %48 = arith.addf %45, %47 : vector<16x256xf32>
    %c16_i32 = arith.constant 16 : i32
    %49 = tpu.dynamic_rotate %48 by %c16_i32 dim 1 : vector<16x256xf32>, i32 -> vector<16x256xf32>
    %50 = vector.broadcast %18 : vector<1x256xf32> to vector<16x256xf32>
    %51 = arith.mulf %50, %49 : vector<16x256xf32>
    %52 = arith.addf %40, %51 : vector<16x256xf32>
    %53 = vector.broadcast %10 : vector<16x1xf32> to vector<16x256xf32>
    %54 = arith.mulf %53, %29 : vector<16x256xf32>
    %55 = vector.broadcast %11 : vector<16x1xf32> to vector<16x256xf32>
    %56 = arith.mulf %55, %26 : vector<16x256xf32>
    %57 = arith.addf %54, %56 : vector<16x256xf32>
    %58 = vector.broadcast %12 : vector<16x1xf32> to vector<16x256xf32>
    %59 = arith.mulf %58, %32 : vector<16x256xf32>
    %60 = arith.addf %57, %59 : vector<16x256xf32>
    %c240_i32 = arith.constant 240 : i32
    %61 = tpu.dynamic_rotate %60 by %c240_i32 dim 1 : vector<16x256xf32>, i32 -> vector<16x256xf32>
    %62 = vector.broadcast %19 : vector<1x256xf32> to vector<16x256xf32>
    %63 = arith.mulf %62, %61 : vector<16x256xf32>
    %64 = arith.addf %52, %63 : vector<16x256xf32>
    %65 = vector.broadcast %14 : vector<16x1xf32> to vector<16x256xf32>
    %66 = arith.addf %64, %65 : vector<16x256xf32>
    %cst_11 = arith.constant 0.000000e+00 : f32
    %67 = vector.broadcast %cst_11 : f32 to vector<16x256xf32>
    %68 = arith.maximumf %66, %67 : vector<16x256xf32>
    %69 = arith.truncf %68 : vector<16x256xf32> to vector<16x256xbf16>
    %cst_12 = arith.constant dense<0.000000e+00> : vector<16x256xf32>
    %70 = tpu.matmul %1, %69, %cst_12 {dimension_numbers = #tpu.dot_dimension_numbers<[1], [0], [0], [1], [0, 0, 1, 1], [], []>} : vector<16x16xbf16>, vector<16x256xbf16>, vector<16x256xf32> -> vector<16x256xf32>
    %71 = vector.broadcast %15 : vector<16x1xf32> to vector<16x256xf32>
    %72 = arith.addf %70, %71 : vector<16x256xf32>
    %73 = arith.extf %21 : vector<16x256xbf16> to vector<16x256xf32>
    %74 = arith.addf %72, %73 : vector<16x256xf32>
    %cst_13 = arith.constant 0.000000e+00 : f32
    %75 = vector.broadcast %cst_13 : f32 to vector<16x256xf32>
    %76 = arith.maximumf %74, %75 : vector<16x256xf32>
    %77 = arith.truncf %76 : vector<16x256xf32> to vector<16x256xbf16>
    %c0_14 = arith.constant 0 : index
    %c0_15 = arith.constant 0 : index
    %c0_16 = arith.constant 0 : index
    %78 = vector.load %arg6[%c0_14, %c0_15, %c0_16] : memref<1x16x256xbf16, #tpu.memory_space<vmem>>, vector<1x16x256xbf16>
    %79 = vector.shape_cast %78 : vector<1x16x256xbf16> to vector<16x256xbf16>
    %80 = vector.shape_cast %77 : vector<16x256xbf16> to vector<1x16x256xbf16>
    tpu.vector_store %arg6[%c0_14, %c0_15, %c0_16], %80 {strides = array<i32>} : memref<1x16x256xbf16, #tpu.memory_space<vmem>>, vector<1x16x256xbf16>,
    return
  }
  func.func @transform_0(%arg0: i32) -> (i32, i32, i32) {
    %c0_i32 = arith.constant 0 : i32
    %c0_i32_0 = arith.constant 0 : i32
    %c0_i32_1 = arith.constant 0 : i32
    return %arg0, %c0_i32, %c0_i32_0 : i32, i32, i32
  }
  func.func @transform_1(%arg0: i32) -> (i32, i32) {
    %c0_i32 = arith.constant 0 : i32
    %c0_i32_0 = arith.constant 0 : i32
    %c0_i32_1 = arith.constant 0 : i32
    return %c0_i32, %c0_i32_0 : i32, i32
  }
  func.func @transform_2(%arg0: i32) -> (i32, i32) {
    %c0_i32 = arith.constant 0 : i32
    %c0_i32_0 = arith.constant 0 : i32
    %c0_i32_1 = arith.constant 0 : i32
    return %c0_i32, %c0_i32_0 : i32, i32
  }
  func.func @transform_3(%arg0: i32) -> (i32, i32) {
    %c0_i32 = arith.constant 0 : i32
    %c0_i32_0 = arith.constant 0 : i32
    %c0_i32_1 = arith.constant 0 : i32
    return %c0_i32, %c0_i32_0 : i32, i32
  }
  func.func @transform_4(%arg0: i32) -> (i32, i32) {
    %c0_i32 = arith.constant 0 : i32
    %c0_i32_0 = arith.constant 0 : i32
    %c0_i32_1 = arith.constant 0 : i32
    return %c0_i32, %c0_i32_0 : i32, i32
  }
  func.func @transform_5(%arg0: i32) -> (i32, i32, i32) {
    %c0_i32 = arith.constant 0 : i32
    %c0_i32_0 = arith.constant 0 : i32
    %c0_i32_1 = arith.constant 0 : i32
    return %arg0, %c0_i32, %c0_i32_0 : i32, i32, i32
  }
}

</mosaic_0001>

<llo_original>
// kernel: tpu_custom_call.1
$region0: #{tpu_custom_call.1}
  #allocation0 [shape = 'u32[]', space=smem, size = 0x4, offset = 0x4, fixed_abs, tag = 'smem constant byte address 0x4 - core index']
  #allocation1 [shape = 'u32[144,128]{1,0:T(1,128)}', space=vmem, size = 0x12000, scoped, tag = 'internal scratch']
  %s0 = inlined_call_operand.hbm [shape: bf16[2,16,256], index: 0, kind: input, shape index: {}]
  %s1 = inlined_call_operand.hbm [shape: bf16[16,16], index: 1, kind: input, shape index: {}]
  %s2 = inlined_call_operand.hbm [shape: bf16[16,16], index: 2, kind: input, shape index: {}]
  %s3 = inlined_call_operand.hbm [shape: f32[16,16], index: 3, kind: input, shape index: {}]
  %s4 = inlined_call_operand.vmem [shape: f32[4,256], index: 4, kind: input, shape index: {}]
  %s5 = inlined_call_operand.hbm [shape: bf16[2,16,256], index: 5, kind: output, shape index: {}]
  %s6 = sld [smem:[#allocation0]]
  $region69: #{tpu_custom_call.1} parent=0
    _
  %s8 = ssub.s32 1, %s6
  %s9 = scalar_select 0, %s8, %s6
  $region1: #{tpu_custom_call.1} parent=0
    #allocation2 [shape = 'u8[16384]{0}', space=vmem, size = 0x4000, scoped, tag = 'input window, operand 0']
    #allocation3 [shape = 's32[2]{0}', space=sflag, size = 0x8, scoped, tag = 'scoped memory for tpu_custom_call.1']
    #allocation4 [shape = 's32[2]{0}', space=sflag, size = 0x8, scoped, tag = 'scoped memory for tpu_custom_call.1']
    #allocation5 [shape = 'u8[4096]{0}', space=vmem, size = 0x1000, scoped, tag = 'input window, operand 1, single buffered']
    #allocation6 [shape = 's32[1]{0}', space=sflag, size = 0x4, scoped, tag = 'scoped memory for tpu_custom_call.1']
    #allocation7 [shape = 'u8[4096]{0}', space=vmem, size = 0x1000, scoped, tag = 'input window, operand 2, single buffered']
    #allocation8 [shape = 'u8[8192]{0}', space=vmem, size = 0x2000, scoped, tag = 'input window, operand 3, single buffered']
    #allocation9 [shape = 's32[1]{0}', space=sflag, size = 0x4, scoped, tag = 'scoped memory for tpu_custom_call.1']
    #allocation10 [shape = 'u8[16384]{0}', space=vmem, size = 0x4000, scoped, tag = 'output window, operand 0']
    %10 = vsyncpa [#allocation3], 0
    %s11 = scalar_lea.sflag [#allocation3], 1
    %12 = vsyncpa %s11, 0
    %13 = vsyncpa [#allocation6], 0
    %14 = vsyncpa [#allocation9], 0
    %15 = vsyncpa [#allocation4], 0
    %s16 = scalar_lea.sflag [#allocation4], 1
    %17 = vsyncpa %s16, 0
    loop: start=0, step=1, limit=4
    $region2: #{tpu_custom_call.1} parent=1 // loop_pre_header
      _
    $region3: #{tpu_custom_call.1} parent=1 // loop_header
      %s19 = sphi 0, %s23
      %p20 = scmp.ge.s32.totalorder %s19, 4
      %s29 = sphi 0, %s31
      %s32 = sphi 0, %s29
      %s33 = sphi 0, %s32
      %s49 = sphi 0, %s33
      %s53 = sphi 0, %s53
      %s55 = sphi 0, %s53
      %s56 = sphi 0, %s55
      %s70 = sphi 0, %s56
      %s74 = sphi 0, %s74
      %s76 = sphi 0, %s74
      %s77 = sphi 0, %s76
      %s91 = sphi 0, %s77
      %s95 = sphi 0, %s95
      %s97 = sphi 0, %s95
      %s98 = sphi 0, %s97
      %s112 = sphi 0, %s98
      %s116 = sphi 0, %s116
      %s118 = sphi 0, %s116
      %s119 = sphi 0, %s118
      %s133 = sphi 0, %s119
      %s139 = sphi 0, %s141
      %s142 = sphi 0, %s139
      %s143 = sphi 0, %s142
      %s159 = sphi 0, %s143
    $region4: #{tpu_custom_call.1} parent=1 // loop_header_branch
      %22 = sbr.rel (%p20) target = $region8
    $region5: #{tpu_custom_call.1} parent=1 // loop_body
      %s24 = ssub.s32 %s19, 1
      %s25 = ssub.s32 %s19, 2
      %s26 = sadd.s32 %s19, 1
      %s27 = ssub.s32 %s19, %s26
      %p28 = scmp.eq.s32.totalorder %s27, 0
      %s30 = sadd.s32 %s29, 1
      %s31 = scalar_select %p28, %s29, %s30
      %p34 = pneg %p28
      %p35 = scmp.eq.s32.totalorder %s19, 1
      %p36 = por %p34, %p35
      %p37 = scmp.ne.s32.totalorder %s29, %s32
      %p38 = scmp.eq.s32.totalorder %s19, 0
      %p39 = por %p37, %p38
      %p40 = scmp.ne.s32.totalorder %s29, %s32
      %p41 = scmp.eq.s32.totalorder %s24, 1
      %p42 = por %p40, %p41
      %p43 = scmp.ne.s32.totalorder %s32, %s33
      %p44 = scmp.eq.s32.totalorder %s24, 0
      %p45 = por %p43, %p44
      %p46 = scmp.ne.s32.totalorder %s32, %s33
      %p47 = scmp.eq.s32.totalorder %s25, 1
      %p48 = por %p46, %p47
      %p50 = scmp.ne.s32.totalorder %s33, %s49
      %p51 = scmp.eq.s32.totalorder %s25, 0
      %p52 = por %p50, %p51
      %s54 = sadd.s32 %s53, 1
      %p57 = scmp.eq.s32.totalorder %s19, 1
      %p58 = scmp.ne.s32.totalorder %s53, %s55
      %p59 = scmp.eq.s32.totalorder %s19, 0
      %p60 = por %p58, %p59
      %p61 = scmp.ne.s32.totalorder %s53, %s55
      %p62 = scmp.eq.s32.totalorder %s24, 1
      %p63 = por %p61, %p62
      %p64 = scmp.ne.s32.totalorder %s55, %s56
      %p65 = scmp.eq.s32.totalorder %s24, 0
      %p66 = por %p64, %p65
      %p67 = scmp.ne.s32.totalorder %s55, %s56
      %p68 = scmp.eq.s32.totalorder %s25, 1
      %p69 = por %p67, %p68
      %p71 = scmp.ne.s32.totalorder %s56, %s70
      %p72 = scmp.eq.s32.totalorder %s25, 0
      %p73 = por %p71, %p72
      %s75 = sadd.s32 %s74, 1
      %p78 = scmp.eq.s32.totalorder %s19, 1
      %p79 = scmp.ne.s32.totalorder %s74, %s76
      %p80 = scmp.eq.s32.totalorder %s19, 0
      %p81 = por %p79, %p80
      %p82 = scmp.ne.s32.totalorder %s74, %s76
      %p83 = scmp.eq.s32.totalorder %s24, 1
      %p84 = por %p82, %p83
      %p85 = scmp.ne.s32.totalorder %s76, %s77
      %p86 = scmp.eq.s32.totalorder %s24, 0
      %p87 = por %p85, %p86
      %p88 = scmp.ne.s32.totalorder %s76, %s77
      %p89 = scmp.eq.s32.totalorder %s25, 1
      %p90 = por %p88, %p89
      %p92 = scmp.ne.s32.totalorder %s77, %s91
      %p93 = scmp.eq.s32.totalorder %s25, 0
      %p94 = por %p92, %p93
      %s96 = sadd.s32 %s95, 1
      %p99 = scmp.eq.s32.totalorder %s19, 1
      %p100 = scmp.ne.s32.totalorder %s95, %s97
      %p101 = scmp.eq.s32.totalorder %s19, 0
      %p102 = por %p100, %p101
      %p103 = scmp.ne.s32.totalorder %s95, %s97
      %p104 = scmp.eq.s32.totalorder %s24, 1
      %p105 = por %p103, %p104
      %p106 = scmp.ne.s32.totalorder %s97, %s98
      %p107 = scmp.eq.s32.totalorder %s24, 0
      %p108 = por %p106, %p107
      %p109 = scmp.ne.s32.totalorder %s97, %s98
      %p110 = scmp.eq.s32.totalorder %s25, 1
      %p111 = por %p109, %p110
      %p113 = scmp.ne.s32.totalorder %s98, %s112
      %p114 = scmp.eq.s32.totalorder %s25, 0
      %p115 = por %p113, %p114
      %s117 = sadd.s32 %s116, 1
      %p120 = scmp.eq.s32.totalorder %s19, 1
      %p121 = scmp.ne.s32.totalorder %s116, %s118
      %p122 = scmp.eq.s32.totalorder %s19, 0
      %p123 = por %p121, %p122
      %p124 = scmp.ne.s32.totalorder %s116, %s118
      %p125 = scmp.eq.s32.totalorder %s24, 1
      %p126 = por %p124, %p125
      %p127 = scmp.ne.s32.totalorder %s118, %s119
      %p128 = scmp.eq.s32.totalorder %s24, 0
      %p129 = por %p127, %p128
      %p130 = scmp.ne.s32.totalorder %s118, %s119
      %p131 = scmp.eq.s32.totalorder %s25, 1
      %p132 = por %p130, %p131
      %p134 = scmp.ne.s32.totalorder %s119, %s133
      %p135 = scmp.eq.s32.totalorder %s25, 0
      %p136 = por %p134, %p135
      %s137 = ssub.s32 %s19, %s26
      %p138 = scmp.eq.s32.totalorder %s137, 0
      %s140 = sadd.s32 %s139, 1
      %s141 = scalar_select %p138, %s139, %s140
      %p144 = pneg %p138
      %p145 = scmp.eq.s32.totalorder %s19, 1
      %p146 = por %p144, %p145
      %p147 = scmp.ne.s32.totalorder %s139, %s142
      %p148 = scmp.eq.s32.totalorder %s19, 0
      %p149 = por %p147, %p148
      %p150 = scmp.ne.s32.totalorder %s139, %s142
      %p151 = scmp.eq.s32.totalorder %s24, 1
      %p152 = por %p150, %p151
      %p153 = scmp.ne.s32.totalorder %s142, %s143
      %p154 = scmp.eq.s32.totalorder %s24, 0
      %p155 = por %p153, %p154
      %p156 = scmp.ne.s32.totalorder %s142, %s143
      %p157 = scmp.eq.s32.totalorder %s25, 1
      %p158 = por %p156, %p157
      %p160 = scmp.ne.s32.totalorder %s143, %s159
      %p161 = scmp.eq.s32.totalorder %s25, 0
      %p162 = por %p160, %p161
      %p163 = scmp.le.s32.totalorder 1, %s19
      %p164 = scmp.lt.s32.totalorder %s19, 3
      %p165 = pnand %p163, %p164
      %p166 = pneg %p165
      // Predicated region
      $region9: #{tpu_custom_call.1} parent=5 // pred_check
        _
      $region10: #{tpu_custom_call.1} parent=5 // pred_check_branch
        %168 = sbr.rel (%p165) target = $region12
      $region11: #{tpu_custom_call.1} parent=5 // pred_region
        %s169 = ssub.s32 %s19, 1
        // Predicated region
        $region13: #{tpu_custom_call.1} parent=11 // pred_check
          %p170 = pneg %p66
        $region14: #{tpu_custom_call.1} parent=11 // pred_check_branch
          %172 = sbr.rel (%p170) target = $region16
        $region15: #{tpu_custom_call.1} parent=11 // pred_region
          %s174 = ssub.s32 128, 128
          %175 = vsyncadd [#allocation6], %s174
          %s176 = sshll.u32 [#allocation5], 4
          %s177 = int_to_ptr.vmem [resolvable:$true] %s176
          %182 = dma.hbm_to_vmem [thread:$0]  %s1, 128, %s177, [#allocation6], 64, 64, 4
        $region16: #{tpu_custom_call.1} parent=11 // pred_fallthru
          _
        // Predicated region
        $region17: #{tpu_custom_call.1} parent=11 // pred_check
          %p183 = pneg %p87
        $region18: #{tpu_custom_call.1} parent=11 // pred_check_branch
          %185 = sbr.rel (%p183) target = $region20
        $region19: #{tpu_custom_call.1} parent=11 // pred_region
          %s187 = ssub.s32 128, 128
          %188 = vsyncadd [#allocation6], %s187
          %s189 = sshll.u32 [#allocation7], 4
          %s190 = int_to_ptr.vmem [resolvable:$true] %s189
          %195 = dma.hbm_to_vmem [thread:$0]  %s2, 128, %s190, [#allocation6], 64, 64, 4
        $region20: #{tpu_custom_call.1} parent=11 // pred_fallthru
          _
        // Predicated region
        $region21: #{tpu_custom_call.1} parent=11 // pred_check
          %p196 = pneg %p108
        $region22: #{tpu_custom_call.1} parent=11 // pred_check_branch
          %198 = sbr.rel (%p196) target = $region24
        $region23: #{tpu_custom_call.1} parent=11 // pred_region
          %s200 = ssub.s32 256, 256
          %201 = vsyncadd [#allocation9], %s200
          %s202 = sshll.u32 [#allocation8], 4
          %s203 = int_to_ptr.vmem [resolvable:$true] %s202
          %208 = dma.hbm_to_vmem [thread:$0]  %s3, 256, %s203, [#allocation9], 128, 128, 8
        $region24: #{tpu_custom_call.1} parent=11 // pred_fallthru
          _
        // Predicated region
        $region25: #{tpu_custom_call.1} parent=11 // pred_check
          %p209 = pneg %p129
        $region26: #{tpu_custom_call.1} parent=11 // pred_check_branch
          %211 = sbr.rel (%p209) target = $region28
        $region27: #{tpu_custom_call.1} parent=11 // pred_region
          _
        $region28: #{tpu_custom_call.1} parent=11 // pred_fallthru
          _
      $region12: #{tpu_custom_call.1} parent=5 // pred_fallthru
        _
      %p212 = scmp.lt.s32.totalorder %s19, 2
      // Predicated region
      $region29: #{tpu_custom_call.1} parent=5 // pred_check
        %p213 = pneg %p212
      $region30: #{tpu_custom_call.1} parent=5 // pred_check_branch
        %215 = sbr.rel (%p213) target = $region32
      $region31: #{tpu_custom_call.1} parent=5 // pred_region
        // Predicated region
        $region33: #{tpu_custom_call.1} parent=31 // pred_check
          %p216 = pneg %p39
        $region34: #{tpu_custom_call.1} parent=31 // pred_check_branch
          %218 = sbr.rel (%p216) target = $region36
        $region35: #{tpu_custom_call.1} parent=31 // pred_region
          %s219 = sand.u32 %s29, 1
          %s220 = scalar_lea.sflag [#allocation3], %s219
          %s221 = sand.u32 %s29, 1
          %s222 = smul.addr %s221, 16
          %s223 = scalar_lea.vmem [#allocation2], %s222
          %s225 = ssub.s32 256, 256
          %226 = vsyncadd %s220, %s225
          %s227 = smul.addr %s19, 4
          %s228 = smul.addr %s227, 64
          %s229 = scalar_lea.hbm %s0, %s228
          %s230 = sshll.u32 %s223, 4
          %s231 = int_to_ptr.vmem [resolvable:$true] %s230
          %236 = dma.hbm_to_vmem [thread:$0]  %s229, 256, %s231, %s220, 128, 128, 8
        $region36: #{tpu_custom_call.1} parent=31 // pred_fallthru
          _
      $region32: #{tpu_custom_call.1} parent=5 // pred_fallthru
        _
      %p237 = scmp.le.s32.totalorder 1, %s19
      %p238 = scmp.lt.s32.totalorder %s19, 3
      %p239 = pnand %p237, %p238
      %p240 = pneg %p239
      // Predicated region
      $region37: #{tpu_custom_call.1} parent=5 // pred_check
        _
      $region38: #{tpu_custom_call.1} parent=5 // pred_check_branch
        %242 = sbr.rel (%p239) target = $region40
      $region39: #{tpu_custom_call.1} parent=5 // pred_region
        %s243 = ssub.s32 %s19, 1
        %s244 = sand.u32 %s32, 1
        %s245 = scalar_lea.sflag [#allocation3], %s244
        %s246 = sand.u32 %s32, 1
        %s247 = smul.addr %s246, 16
        %s248 = scalar_lea.vmem [#allocation2], %s247
        // Predicated region
        $region41: #{tpu_custom_call.1} parent=39 // pred_check
          %p249 = pneg %p45
        $region42: #{tpu_custom_call.1} parent=39 // pred_check_branch
          %251 = sbr.rel (%p249) target = $region44
        $region43: #{tpu_custom_call.1} parent=39 // pred_region
          %252 = dma.done %s245, 256
        $region44: #{tpu_custom_call.1} parent=39 // pred_fallthru
          _
        // Predicated region
        $region45: #{tpu_custom_call.1} parent=39 // pred_check
          %p253 = pneg %p66
        $region46: #{tpu_custom_call.1} parent=39 // pred_check_branch
          %255 = sbr.rel (%p253) target = $region48
        $region47: #{tpu_custom_call.1} parent=39 // pred_region
          %256 = dma.done [#allocation6], 128
        $region48: #{tpu_custom_call.1} parent=39 // pred_fallthru
          _
        // Predicated region
        $region49: #{tpu_custom_call.1} parent=39 // pred_check
          %p257 = pneg %p87
        $region50: #{tpu_custom_call.1} parent=39 // pred_check_branch
          %259 = sbr.rel (%p257) target = $region52
        $region51: #{tpu_custom_call.1} parent=39 // pred_region
          %260 = dma.done [#allocation6], 128
        $region52: #{tpu_custom_call.1} parent=39 // pred_fallthru
          _
        // Predicated region
        $region53: #{tpu_custom_call.1} parent=39 // pred_check
          %p261 = pneg %p108
        $region54: #{tpu_custom_call.1} parent=39 // pred_check_branch
          %263 = sbr.rel (%p261) target = $region56
        $region55: #{tpu_custom_call.1} parent=39 // pred_region
          %264 = dma.done [#allocation9], 256
        $region56: #{tpu_custom_call.1} parent=39 // pred_fallthru
          _
        %s265 = sand.u32 %s32, 1
        %s266 = scalar_lea.sflag [#allocation3], %s265
        %s267 = sand.u32 %s32, 1
        %s268 = smul.addr %s267, 16
        %s269 = scalar_lea.vmem [#allocation2], %s268
        %p270 = pneg %p45
        %p271 = pneg %p42
        %p272 = pneg %p66
        %p273 = pneg %p63
        %p274 = pneg %p87
        %p275 = pneg %p84
        %p276 = pneg %p108
        %p277 = pneg %p105
        %p278 = pneg %p129
        %p279 = pneg %p126
        %p280 = pneg %p155
        %p281 = pneg %p152
        %s282 = sand.u32 %s142, 1
        %s283 = scalar_lea.sflag [#allocation4], %s282
        %s284 = sand.u32 %s142, 1
        %s285 = smul.addr %s284, 16
        %s286 = scalar_lea.vmem [#allocation10], %s285
        %v288 = vld [vmem:[#allocation5] sm:$0xf]
        %v289 = vld [vmem:[#allocation5 + $0x4] sm:$0xf]
        %v290 = vld [vmem:[#allocation7] sm:$0xf]
        %v291 = vld [vmem:[#allocation7 + $0x4] sm:$0xf]
        %v292 = vld [vmem:[#allocation8] sm:$0xff]
        %v293 = vld [vmem:[#allocation8 + $0x8] sm:$0xff]
        %v294 = vld [vmem:[%s4] sm:$0xff]
        %v295 = vld [vmem:[%s248] sm:$0xff]
        %v296 = vld [vmem:[%s248 + $0x8] sm:$0xff]
        %298 = vset.pattern.permute.xlu0 9
        %299 = vperm.xlu0 %298, %v292
        %v300 = vpop.permute.xlu0 %299
        %303 = vset.pattern.permute.xlu0 9
        %304 = vperm.xlu0 %303, %v293
        %v305 = vpop.permute.xlu0 %304
        %v309 = vunpack.c.l.b16 %v288
        %v310 = vunpack.c.l.b16 %v289
        %v311 = vpack.c.b16 %v310, %v309
        %v314 = vunpack.c.l.b16 %v295
        %v315 = vunpack.c.h.b16 %v295
        %v316 = vunpack.c.l.b16 %v296
        %v317 = vunpack.c.h.b16 %v296
        %v318 = vpack.c.b16 %v316, %v314
        %v319 = vpack.c.b16 %v317, %v315
        %vm322 = vcmask 130048
        %v324 = vsel %vm322, %v311, 0
        %326 = vmatprep.subr.bf16.mxu0 %v319
        %327 = vmatpush1.bf16.msra.mxu0 %v318
        %328 = vmatprep.subr.bf16.mxu0 0
        %329 = vmatpush1.bf16.msra.mxu0 0
        %330 = vmatprep.subr.bf16.mxu0 0
        %331 = vmatpush1.bf16.msra.mxu0 0
        %332 = vmatprep.subr.bf16.mxu0 0
        %333 = vmatpush1.bf16.msra.mxu0 0
        %334 = vmatprep.subr.bf16.mxu0 0
        %335 = vmatpush1.bf16.msra.mxu0 0
        %336 = vmatprep.subr.bf16.mxu0 0
        %337 = vmatpush1.bf16.msra.mxu0 0
        %338 = vmatprep.subr.bf16.mxu0 0
        %339 = vmatpush1.bf16.msra.mxu0 0
        %340 = vmatprep.subr.bf16.mxu0 0
        %341 = vmatpush1.bf16.msra.mxu0 0
        %342 = vmatprep.subr.bf16.mxu0 0
        %343 = vmatpush1.bf16.msra.mxu0 0
        %344 = vmatprep.subr.bf16.mxu0 0
        %345 = vmatpush1.bf16.msra.mxu0 0
        %346 = vmatprep.subr.bf16.mxu0 0
        %347 = vmatpush1.bf16.msra.mxu0 0
        %348 = vmatprep.subr.bf16.mxu0 0
        %349 = vmatpush1.bf16.msra.mxu0 0
        %350 = vmatprep.subr.bf16.mxu0 0
        %351 = vmatpush1.bf16.msra.mxu0 0
        %352 = vmatprep.subr.bf16.mxu0 0
        %353 = vmatpush1.bf16.msra.mxu0 0
        %354 = vmatprep.subr.bf16.mxu0 0
        %355 = vmatpush1.bf16.msra.mxu0 0
        %356 = vmatprep.subr.bf16.mxu0 0
        %357 = vmatpush1.bf16.msra.mxu0 0
        %358 = vmatprep.mubr.bf16.mxu0 0
        %359 = vmatmul.mubr.bf16.gmra.mrb[0].mxu0 %v324
        %v360 = vpop.f32.mrb[0].mxu0
        %v361 = vadd.f32 %v300, %v360
        %v362 = vpop.f32.mrb[0].mxu0
        %v363 = vadd.f32 %v300, %v362
        %v364 = vpop.f32.mrb[0].mxu0
        %v365 = vadd.f32 %v305, %v364
        %v366 = vpop.f32.mrb[0].mxu0
        %v367 = vadd.f32 %v305, %v366
        %368 = vdwg.mxu0
        %v369 = vmax.f32 %v361, 0.0
        %v370 = vmax.f32 %v363, 0.0
        %v371 = vmax.f32 %v365, 0.0
        %v372 = vmax.f32 %v367, 0.0
        %373 = vrot.lane.b32.xlu0 %v369, 1
        %v374 = vpop.permute.xlu0 %373
        %375 = vrot.lane.b32.xlu0 %v371, 1
        %v376 = vpop.permute.xlu0 %375
        %377 = vrot.lane.b32.xlu0 %v370, 1
        %v378 = vpop.permute.xlu0 %377
        %379 = vrot.lane.b32.xlu0 %v372, 1
        %v380 = vpop.permute.xlu0 %379
        %v381 = vlaneseq
        %v382 = vand.u32 %v381, 127
        %vm383 = vcmp.lt.s32.totalorder %v382, 1
        %v384 = vsel %vm383, %v374, %v378
        %v385 = vsel %vm383, %v376, %v380
        %v386 = vsel %vm383, %v378, %v374
        %v387 = vsel %vm383, %v380, %v376
        %v389 = vlaneseq
        %v390 = vshrl.u32 %v389, 7
        %v391 = vsub.s32 0, %v390
        %v392 = vrot.slane %v294, %v391
        %v393 = vlaneseq
        %v394 = vshrl.u32 %v393, 7
        %v395 = vsub.s32 4, %v394
        %v396 = vrot.slane %v294, %v395
        %v399 = vlaneseq
        %v400 = vshrl.u32 %v399, 7
        %v401 = vsub.s32 0, %v400
        %v402 = vrot.slane %v392, %v401
        %v403 = vlaneseq
        %v404 = vshrl.u32 %v403, 7
        %v405 = vsub.s32 0, %v404
        %v406 = vrot.slane %v396, %v405
        %v407 = vmul.f32 %v402, %v386
        %v408 = vmul.f32 %v406, %v384
        %v409 = vmul.f32 %v402, %v387
        %v410 = vmul.f32 %v406, %v385
        %411 = vrot.lane.b32.xlu0 %v369, 127
        %v412 = vpop.permute.xlu0 %411
        %413 = vrot.lane.b32.xlu0 %v371, 127
        %v414 = vpop.permute.xlu0 %413
        %415 = vrot.lane.b32.xlu0 %v370, 127
        %v416 = vpop.permute.xlu0 %415
        %417 = vrot.lane.b32.xlu0 %v372, 127
        %v418 = vpop.permute.xlu0 %417
        %vm419 = vcmp.lt.s32.totalorder %v382, 127
        %v420 = vsel %vm419, %v412, %v416
        %v421 = vsel %vm419, %v414, %v418
        %v422 = vsel %vm419, %v416, %v412
        %v423 = vsel %vm419, %v418, %v414
        %v424 = vlaneseq
        %v425 = vshrl.u32 %v424, 7
        %v426 = vsub.s32 1, %v425
        %v427 = vrot.slane %v294, %v426
        %v428 = vlaneseq
        %v429 = vshrl.u32 %v428, 7
        %v430 = vsub.s32 5, %v429
        %v431 = vrot.slane %v294, %v430
        %v434 = vlaneseq
        %v435 = vshrl.u32 %v434, 7
        %v436 = vsub.s32 1, %v435
        %v437 = vrot.slane %v427, %v436
        %v438 = vlaneseq
        %v439 = vshrl.u32 %v438, 7
        %v440 = vsub.s32 1, %v439
        %v441 = vrot.slane %v431, %v440
        %v442 = vmul.f32 %v437, %v420
        %v443 = vmul.f32 %v441, %v422
        %v444 = vmul.f32 %v437, %v421
        %v445 = vmul.f32 %v441, %v423
        %446 = vset.pattern.permute.xlu0 3
        %447 = vperm.xlu0 %446, %v292
        %v448 = vpop.permute.xlu0 %447
        %450 = vset.pattern.permute.xlu0 3
        %451 = vperm.xlu0 %450, %v293
        %v452 = vpop.permute.xlu0 %451
        %v454 = vmul.f32 %v448, %v407
        %v455 = vmul.f32 %v448, %v408
        %v456 = vmul.f32 %v452, %v409
        %v457 = vmul.f32 %v452, %v410
        %458 = vset.pattern.permute.xlu0 4
        %459 = vperm.xlu0 %458, %v292
        %v460 = vpop.permute.xlu0 %459
        %462 = vset.pattern.permute.xlu0 4
        %463 = vperm.xlu0 %462, %v293
        %v464 = vpop.permute.xlu0 %463
        %v466 = vmul.f32 %v460, %v369
        %v467 = vmul.f32 %v460, %v370
        %v468 = vmul.f32 %v464, %v371
        %v469 = vmul.f32 %v464, %v372
        %v470 = vadd.f32 %v454, %v466
        %v471 = vadd.f32 %v455, %v467
        %v472 = vadd.f32 %v456, %v468
        %v473 = vadd.f32 %v457, %v469
        %474 = vset.pattern.permute.xlu0 5
        %475 = vperm.xlu0 %474, %v292
        %v476 = vpop.permute.xlu0 %475
        %478 = vset.pattern.permute.xlu0 5
        %479 = vperm.xlu0 %478, %v293
        %v480 = vpop.permute.xlu0 %479
        %v482 = vmul.f32 %v476, %v442
        %v483 = vmul.f32 %v476, %v443
        %v484 = vmul.f32 %v480, %v444
        %v485 = vmul.f32 %v480, %v445
        %v486 = vadd.f32 %v470, %v482
        %v487 = vadd.f32 %v471, %v483
        %v488 = vadd.f32 %v472, %v484
        %v489 = vadd.f32 %v473, %v485
        %490 = vset.pattern.permute.xlu0 0
        %491 = vperm.xlu0 %490, %v292
        %v492 = vpop.permute.xlu0 %491
        %494 = vset.pattern.permute.xlu0 0
        %495 = vperm.xlu0 %494, %v293
        %v496 = vpop.permute.xlu0 %495
        %v498 = vmul.f32 %v492, %v407
        %v499 = vmul.f32 %v492, %v408
        %v500 = vmul.f32 %v496, %v409
        %v501 = vmul.f32 %v496, %v410
        %502 = vset.pattern.permute.xlu0 1
        %503 = vperm.xlu0 %502, %v292
        %v504 = vpop.permute.xlu0 %503
        %506 = vset.pattern.permute.xlu0 1
        %507 = vperm.xlu0 %506, %v293
        %v508 = vpop.permute.xlu0 %507
        %v510 = vmul.f32 %v504, %v369
        %v511 = vmul.f32 %v504, %v370
        %v512 = vmul.f32 %v508, %v371
        %v513 = vmul.f32 %v508, %v372
        %v514 = vadd.f32 %v498, %v510
        %v515 = vadd.f32 %v499, %v511
        %v516 = vadd.f32 %v500, %v512
        %v517 = vadd.f32 %v501, %v513
        %518 = vset.pattern.permute.xlu0 2
        %519 = vperm.xlu0 %518, %v292
        %v520 = vpop.permute.xlu0 %519
        %522 = vset.pattern.permute.xlu0 2
        %523 = vperm.xlu0 %522, %v293
        %v524 = vpop.permute.xlu0 %523
        %v526 = vmul.f32 %v520, %v442
        %v527 = vmul.f32 %v520, %v443
        %v528 = vmul.f32 %v524, %v444
        %v529 = vmul.f32 %v524, %v445
        %v530 = vadd.f32 %v514, %v526
        %v531 = vadd.f32 %v515, %v527
        %v532 = vadd.f32 %v516, %v528
        %v533 = vadd.f32 %v517, %v529
        %534 = vrot.lane.b32.xlu0 %v530, 16
        %v535 = vpop.permute.xlu0 %534
        %536 = vrot.lane.b32.xlu0 %v532, 16
        %v537 = vpop.permute.xlu0 %536
        %538 = vrot.lane.b32.xlu0 %v531, 16
        %v539 = vpop.permute.xlu0 %538
        %540 = vrot.lane.b32.xlu0 %v533, 16
        %v541 = vpop.permute.xlu0 %540
        %vm542 = vcmp.lt.s32.totalorder %v382, 16
        %v543 = vsel %vm542, %v535, %v539
        %v544 = vsel %vm542, %v537, %v541
        %v545 = vsel %vm542, %v539, %v535
        %v546 = vsel %vm542, %v541, %v537
        %v547 = vlaneseq
        %v548 = vshrl.u32 %v547, 7
        %v549 = vsub.s32 2, %v548
        %v550 = vrot.slane %v294, %v549
        %v551 = vlaneseq
        %v552 = vshrl.u32 %v551, 7
        %v553 = vsub.s32 6, %v552
        %v554 = vrot.slane %v294, %v553
        %v557 = vlaneseq
        %v558 = vshrl.u32 %v557, 7
        %v559 = vsub.s32 2, %v558
        %v560 = vrot.slane %v550, %v559
        %v561 = vlaneseq
        %v562 = vshrl.u32 %v561, 7
        %v563 = vsub.s32 2, %v562
        %v564 = vrot.slane %v554, %v563
        %v565 = vmul.f32 %v560, %v545
        %v566 = vmul.f32 %v564, %v543
        %v567 = vmul.f32 %v560, %v546
        %v568 = vmul.f32 %v564, %v544
        %v569 = vadd.f32 %v486, %v565
        %v570 = vadd.f32 %v487, %v566
        %v571 = vadd.f32 %v488, %v567
        %v572 = vadd.f32 %v489, %v568
        %573 = vset.pattern.permute.xlu0 6
        %574 = vperm.xlu0 %573, %v292
        %v575 = vpop.permute.xlu0 %574
        %577 = vset.pattern.permute.xlu0 6
        %578 = vperm.xlu0 %577, %v293
        %v579 = vpop.permute.xlu0 %578
        %v581 = vmul.f32 %v575, %v407
        %v582 = vmul.f32 %v575, %v408
        %v583 = vmul.f32 %v579, %v409
        %v584 = vmul.f32 %v579, %v410
        %585 = vset.pattern.permute.xlu0 7
        %586 = vperm.xlu0 %585, %v292
        %v587 = vpop.permute.xlu0 %586
        %589 = vset.pattern.permute.xlu0 7
        %590 = vperm.xlu0 %589, %v293
        %v591 = vpop.permute.xlu0 %590
        %v593 = vmul.f32 %v587, %v369
        %v594 = vmul.f32 %v587, %v370
        %v595 = vmul.f32 %v591, %v371
        %v596 = vmul.f32 %v591, %v372
        %v597 = vadd.f32 %v581, %v593
        %v598 = vadd.f32 %v582, %v594
        %v599 = vadd.f32 %v583, %v595
        %v600 = vadd.f32 %v584, %v596
        %601 = vset.pattern.permute.xlu0 8
        %602 = vperm.xlu0 %601, %v292
        %v603 = vpop.permute.xlu0 %602
        %605 = vset.pattern.permute.xlu0 8
        %606 = vperm.xlu0 %605, %v293
        %v607 = vpop.permute.xlu0 %606
        %v609 = vmul.f32 %v603, %v442
        %v610 = vmul.f32 %v603, %v443
        %v611 = vmul.f32 %v607, %v444
        %v612 = vmul.f32 %v607, %v445
        %v613 = vadd.f32 %v597, %v609
        %v614 = vadd.f32 %v598, %v610
        %v615 = vadd.f32 %v599, %v611
        %v616 = vadd.f32 %v600, %v612
        %617 = vrot.lane.b32.xlu0 %v613, 112
        %v618 = vpop.permute.xlu0 %617
        %619 = vrot.lane.b32.xlu0 %v615, 112
        %v620 = vpop.permute.xlu0 %619
        %621 = vrot.lane.b32.xlu0 %v614, 112
        %v622 = vpop.permute.xlu0 %621
        %623 = vrot.lane.b32.xlu0 %v616, 112
        %v624 = vpop.permute.xlu0 %623
        %vm625 = vcmp.lt.s32.totalorder %v382, 112
        %v626 = vsel %vm625, %v618, %v622
        %v627 = vsel %vm625, %v620, %v624
        %v628 = vsel %vm625, %v622, %v618
        %v629 = vsel %vm625, %v624, %v620
        %v630 = vlaneseq
        %v631 = vshrl.u32 %v630, 7
        %v632 = vsub.s32 3, %v631
        %v633 = vrot.slane %v294, %v632
        %v634 = vlaneseq
        %v635 = vshrl.u32 %v634, 7
        %v636 = vsub.s32 7, %v635
        %v637 = vrot.slane %v294, %v636
        %v640 = vlaneseq
        %v641 = vshrl.u32 %v640, 7
        %v642 = vsub.s32 3, %v641
        %v643 = vrot.slane %v633, %v642
        %v644 = vlaneseq
        %v645 = vshrl.u32 %v644, 7
        %v646 = vsub.s32 3, %v645
        %v647 = vrot.slane %v637, %v646
        %v648 = vmul.f32 %v643, %v626
        %v649 = vmul.f32 %v647, %v628
        %v650 = vmul.f32 %v643, %v627
        %v651 = vmul.f32 %v647, %v629
        %v652 = vadd.f32 %v569, %v648
        %v653 = vadd.f32 %v570, %v649
        %v654 = vadd.f32 %v571, %v650
        %v655 = vadd.f32 %v572, %v651
        %656 = vset.pattern.permute.xlu0 10
        %657 = vperm.xlu0 %656, %v292
        %v658 = vpop.permute.xlu0 %657
        %660 = vset.pattern.permute.xlu0 10
        %661 = vperm.xlu0 %660, %v293
        %v662 = vpop.permute.xlu0 %661
        %v664 = vadd.f32 %v652, %v658
        %v665 = vadd.f32 %v653, %v658
        %v666 = vadd.f32 %v654, %v662
        %v667 = vadd.f32 %v655, %v662
        %v668 = vmax.f32 %v664, 0.0
        %v669 = vmax.f32 %v665, 0.0
        %v670 = vmax.f32 %v666, 0.0
        %v671 = vmax.f32 %v667, 0.0
        %v672 = vpack.c.bf16 %v670, %v668
        %v673 = vpack.c.bf16 %v671, %v669
        %674 = vset.pattern.permute.xlu0 11
        %675 = vperm.xlu0 %674, %v292
        %v676 = vpop.permute.xlu0 %675
        %678 = vset.pattern.permute.xlu0 11
        %679 = vperm.xlu0 %678, %v293
        %v680 = vpop.permute.xlu0 %679
        %v684 = vunpack.c.l.b16 %v290
        %v685 = vunpack.c.l.b16 %v291
        %v686 = vpack.c.b16 %v685, %v684
        %v688 = vsel %vm322, %v686, 0
        %690 = vmatprep.subr.bf16.mxu0 %v673
        %691 = vmatpush1.bf16.msra.mxu0 %v672
        %692 = vmatprep.subr.bf16.mxu0 0
        %693 = vmatpush1.bf16.msra.mxu0 0
        %694 = vmatprep.subr.bf16.mxu0 0
        %695 = vmatpush1.bf16.msra.mxu0 0
        %696 = vmatprep.subr.bf16.mxu0 0
        %697 = vmatpush1.bf16.msra.mxu0 0
        %698 = vmatprep.subr.bf16.mxu0 0
        %699 = vmatpush1.bf16.msra.mxu0 0
        %700 = vmatprep.subr.bf16.mxu0 0
        %701 = vmatpush1.bf16.msra.mxu0 0
        %702 = vmatprep.subr.bf16.mxu0 0
        %703 = vmatpush1.bf16.msra.mxu0 0
        %704 = vmatprep.subr.bf16.mxu0 0
        %705 = vmatpush1.bf16.msra.mxu0 0
        %706 = vmatprep.subr.bf16.mxu0 0
        %707 = vmatpush1.bf16.msra.mxu0 0
        %708 = vmatprep.subr.bf16.mxu0 0
        %709 = vmatpush1.bf16.msra.mxu0 0
        %710 = vmatprep.subr.bf16.mxu0 0
        %711 = vmatpush1.bf16.msra.mxu0 0
        %712 = vmatprep.subr.bf16.mxu0 0
        %713 = vmatpush1.bf16.msra.mxu0 0
        %714 = vmatprep.subr.bf16.mxu0 0
        %715 = vmatpush1.bf16.msra.mxu0 0
        %716 = vmatprep.subr.bf16.mxu0 0
        %717 = vmatpush1.bf16.msra.mxu0 0
        %718 = vmatprep.subr.bf16.mxu0 0
        %719 = vmatpush1.bf16.msra.mxu0 0
        %720 = vmatprep.subr.bf16.mxu0 0
        %721 = vmatpush1.bf16.msra.mxu0 0
        %722 = vmatprep.mubr.bf16.mxu0 0
        %723 = vmatmul.mubr.bf16.gmra.mrb[0].mxu0 %v688
        %v724 = vpop.f32.mrb[0].mxu0
        %v725 = vadd.f32 %v676, %v724
        %v726 = vpop.f32.mrb[0].mxu0
        %v727 = vadd.f32 %v676, %v726
        %v728 = vpop.f32.mrb[0].mxu0
        %v729 = vadd.f32 %v680, %v728
        %v730 = vpop.f32.mrb[0].mxu0
        %v731 = vadd.f32 %v680, %v730
        %732 = vdwg.mxu0
        %v733 = vunpack.c.l.bf16 %v295
        %v734 = vunpack.c.h.bf16 %v295
        %v735 = vunpack.c.l.bf16 %v296
        %v736 = vunpack.c.h.bf16 %v296
        %v737 = vadd.f32 %v725, %v733
        %v738 = vadd.f32 %v727, %v734
        %v739 = vadd.f32 %v729, %v735
        %v740 = vadd.f32 %v731, %v736
        %v741 = vmax.f32 %v737, 0.0
        %v742 = vmax.f32 %v738, 0.0
        %v743 = vmax.f32 %v739, 0.0
        %v744 = vmax.f32 %v740, 0.0
        %v745 = vpack.c.bf16 %v743, %v741
        %v746 = vpack.c.bf16 %v744, %v742
        %v749 = vunpack.c.l.b16 %v745
        %v750 = vunpack.c.l.b16 %v746
        %v751 = vunpack.c.h.b16 %v745
        %v752 = vunpack.c.h.b16 %v746
        %v753 = vpack.c.b16 %v750, %v749
        %v754 = vpack.c.b16 %v752, %v751
        %757 = vst [vmem:[%s286] sm:$0xff] %v753
        %758 = vst [vmem:[%s286 + $0x8] sm:$0xff] %v754
        %s759 = sand.u32 %s142, 1
        %s760 = scalar_lea.sflag [#allocation4], %s759
        %s761 = sand.u32 %s142, 1
        %s762 = smul.addr %s761, 16
        %s763 = scalar_lea.vmem [#allocation10], %s762
        // Predicated region
        $region57: #{tpu_custom_call.1} parent=39 // pred_check
          %p764 = pneg %p152
        $region58: #{tpu_custom_call.1} parent=39 // pred_check_branch
          %766 = sbr.rel (%p764) target = $region60
        $region59: #{tpu_custom_call.1} parent=39 // pred_region
          %s768 = ssub.s32 256, 256
          %769 = vsyncadd %s760, %s768
          %s770 = smul.addr %s24, 4
          %s771 = smul.addr %s770, 64
          %s772 = scalar_lea.hbm %s5, %s771
          %s773 = sshll.u32 %s763, 4
          %s774 = int_to_ptr.vmem [resolvable:$true] %s773
          %779 = dma.vmem_to_hbm [thread:$0]  %s774, 256, %s772, %s760, 128, 128, 8
        $region60: #{tpu_custom_call.1} parent=39 // pred_fallthru
          _
      $region40: #{tpu_custom_call.1} parent=5 // pred_fallthru
        _
      %p780 = scmp.le.s32.totalorder 2, %s19
      // Predicated region
      $region61: #{tpu_custom_call.1} parent=5 // pred_check
        %p781 = pneg %p780
      $region62: #{tpu_custom_call.1} parent=5 // pred_check_branch
        %783 = sbr.rel (%p781) target = $region64
      $region63: #{tpu_custom_call.1} parent=5 // pred_region
        %s784 = ssub.s32 %s19, 2
        // Predicated region
        $region65: #{tpu_custom_call.1} parent=63 // pred_check
          %p785 = pneg %p158
        $region66: #{tpu_custom_call.1} parent=63 // pred_check_branch
          %787 = sbr.rel (%p785) target = $region68
        $region67: #{tpu_custom_call.1} parent=63 // pred_region
          %s788 = sand.u32 %s143, 1
          %s789 = scalar_lea.sflag [#allocation4], %s788
          %s790 = sand.u32 %s143, 1
          %s791 = smul.addr %s790, 16
          %s792 = scalar_lea.vmem [#allocation10], %s791
          %793 = dma.done %s789, 256
        $region68: #{tpu_custom_call.1} parent=63 // pred_fallthru
          _
      $region64: #{tpu_custom_call.1} parent=5 // pred_fallthru
        _
    $region6: #{tpu_custom_call.1} parent=1 // loop_footer
      %s23 = sadd.s32 1, %s19
    $region7: #{tpu_custom_call.1} parent=1 // loop_footer_branch
      %18 = sbr.rel target = $region3
    $region8: #{tpu_custom_call.1} parent=1 // loop_exit
      _
    %794 = vsyncpa [#allocation3], 1
    %s795 = scalar_lea.sflag [#allocation3], 1
    %796 = vsyncpa %s795, 1
    %797 = vsyncpa [#allocation6], 1
    %798 = vsyncpa [#allocation9], 1
    %799 = vsyncpa [#allocation4], 1
    %s800 = scalar_lea.sflag [#allocation4], 1
    %801 = vsyncpa %s800, 1

// kernel: tpu_custom_call.1
$region0: #{tpu_custom_call.1}
  #allocation0 [shape = 'u32[]', space=smem, size = 0x4, offset = 0x4, fixed_abs, tag = 'smem constant byte address 0x4 - core index']
  #allocation1 [shape = 'u32[144,128]{1,0:T(1,128)}', space=vmem, size = 0x12000, scoped, tag = 'internal scratch']
  %s0 = inlined_call_operand.hbm [shape: bf16[2,16,256], index: 0, kind: input, shape index: {}]
  %s1 = inlined_call_operand.hbm [shape: bf16[16,16], index: 1, kind: input, shape index: {}]
  %s2 = inlined_call_operand.hbm [shape: bf16[16,16], index: 2, kind: input, shape index: {}]
  %s3 = inlined_call_operand.hbm [shape: f32[16,16], index: 3, kind: input, shape index: {}]
  %s4 = inlined_call_operand.vmem [shape: f32[4,256], index: 4, kind: input, shape index: {}]
  %s5 = inlined_call_operand.hbm [shape: bf16[2,16,256], index: 5, kind: output, shape index: {}]
  %s6 = sld [smem:[#allocation0]]
  $region69: #{tpu_custom_call.1} parent=0
    _
  %s8 = ssub.s32 1, %s6
  %s9 = scalar_select 0, %s8, %s6
  $region1: #{tpu_custom_call.1} parent=0
    #allocation2 [shape = 'u8[16384]{0}', space=vmem, size = 0x4000, scoped, tag = 'input window, operand 0']
    #allocation3 [shape = 's32[2]{0}', space=sflag, size = 0x8, scoped, tag = 'scoped memory for tpu_custom_call.1']
    #allocation4 [shape = 's32[2]{0}', space=sflag, size = 0x8, scoped, tag = 'scoped memory for tpu_custom_call.1']
    #allocation5 [shape = 'u8[4096]{0}', space=vmem, size = 0x1000, scoped, tag = 'input window, operand 1, single buffered']
    #allocation6 [shape = 's32[1]{0}', space=sflag, size = 0x4, scoped, tag = 'scoped memory for tpu_custom_call.1']
    #allocation7 [shape = 'u8[4096]{0}', space=vmem, size = 0x1000, scoped, tag = 'input window, operand 2, single buffered']
    #allocation8 [shape = 'u8[8192]{0}', space=vmem, size = 0x2000, scoped, tag = 'input window, operand 3, single buffered']
    #allocation9 [shape = 's32[1]{0}', space=sflag, size = 0x4, scoped, tag = 'scoped memory for tpu_custom_call.1']
    #allocation10 [shape = 'u8[16384]{0}', space=vmem, size = 0x4000, scoped, tag = 'output window, operand 0']
    %10 = vsyncpa [#allocation3], 0
    %s11 = scalar_lea.sflag [#allocation3], 1
    %12 = vsyncpa %s11, 0
    %13 = vsyncpa [#allocation6], 0
    %14 = vsyncpa [#allocation9], 0
    %15 = vsyncpa [#allocation4], 0
    %s16 = scalar_lea.sflag [#allocation4], 1
    %17 = vsyncpa %s16, 0
    loop: start=0, step=1, limit=4
    $region2: #{tpu_custom_call.1} parent=1 // loop_pre_header
      _
    $region3: #{tpu_custom_call.1} parent=1 // loop_header
      %s19 = sphi 0, %s23
      %p20 = scmp.ge.s32.totalorder %s19, 4
      %s29 = sphi 0, %s31
      %s32 = sphi 0, %s29
      %s33 = sphi 0, %s32
      %s49 = sphi 0, %s33
      %s53 = sphi 0, %s53
      %s55 = sphi 0, %s53
      %s56 = sphi 0, %s55
      %s70 = sphi 0, %s56
      %s74 = sphi 0, %s74
      %s76 = sphi 0, %s74
      %s77 = sphi 0, %s76
      %s91 = sphi 0, %s77
      %s95 = sphi 0, %s95
      %s97 = sphi 0, %s95
      %s98 = sphi 0, %s97
      %s112 = sphi 0, %s98
      %s116 = sphi 0, %s116
      %s118 = sphi 0, %s116
      %s119 = sphi 0, %s118
      %s133 = sphi 0, %s119
      %s139 = sphi 0, %s141
      %s142 = sphi 0, %s139
      %s143 = sphi 0, %s142
      %s159 = sphi 0, %s143
    $region4: #{tpu_custom_call.1} parent=1 // loop_header_branch
      %22 = sbr.rel (%p20) target = $region8
    $region5: #{tpu_custom_call.1} parent=1 // loop_body
      %s24 = ssub.s32 %s19, 1
      %s25 = ssub.s32 %s19, 2
      %s26 = sadd.s32 %s19, 1
      %s27 = ssub.s32 %s19, %s26
      %p28 = scmp.eq.s32.totalorder %s27, 0
      %s30 = sadd.s32 %s29, 1
      %s31 = scalar_select %p28, %s29, %s30
      %p34 = pneg %p28
      %p35 = scmp.eq.s32.totalorder %s19, 1
      %p36 = por %p34, %p35
      %p37 = scmp.ne.s32.totalorder %s29, %s32
      %p38 = scmp.eq.s32.totalorder %s19, 0
      %p39 = por %p37, %p38
      %p40 = scmp.ne.s32.totalorder %s29, %s32
      %p41 = scmp.eq.s32.totalorder %s24, 1
      %p42 = por %p40, %p41
      %p43 = scmp.ne.s32.totalorder %s32, %s33
      %p44 = scmp.eq.s32.totalorder %s24, 0
      %p45 = por %p43, %p44
      %p46 = scmp.ne.s32.totalorder %s32, %s33
      %p47 = scmp.eq.s32.totalorder %s25, 1
      %p48 = por %p46, %p47
      %p50 = scmp.ne.s32.totalorder %s33, %s49
      %p51 = scmp.eq.s32.totalorder %s25, 0
      %p52 = por %p50, %p51
      %s54 = sadd.s32 %s53, 1
      %p57 = scmp.eq.s32.totalorder %s19, 1
      %p58 = scmp.ne.s32.totalorder %s53, %s55
      %p59 = scmp.eq.s32.totalorder %s19, 0
      %p60 = por %p58, %p59
      %p61 = scmp.ne.s32.totalorder %s53, %s55
      %p62 = scmp.eq.s32.totalorder %s24, 1
      %p63 = por %p61, %p62
      %p64 = scmp.ne.s32.totalorder %s55, %s56
      %p65 = scmp.eq.s32.totalorder %s24, 0
      %p66 = por %p64, %p65
      %p67 = scmp.ne.s32.totalorder %s55, %s56
      %p68 = scmp.eq.s32.totalorder %s25, 1
      %p69 = por %p67, %p68
      %p71 = scmp.ne.s32.totalorder %s56, %s70
      %p72 = scmp.eq.s32.totalorder %s25, 0
      %p73 = por %p71, %p72
      %s75 = sadd.s32 %s74, 1
      %p78 = scmp.eq.s32.totalorder %s19, 1
      %p79 = scmp.ne.s32.totalorder %s74, %s76
      %p80 = scmp.eq.s32.totalorder %s19, 0
      %p81 = por %p79, %p80
      %p82 = scmp.ne.s32.totalorder %s74, %s76
      %p83 = scmp.eq.s32.totalorder %s24, 1
      %p84 = por %p82, %p83
      %p85 = scmp.ne.s32.totalorder %s76, %s77
      %p86 = scmp.eq.s32.totalorder %s24, 0
      %p87 = por %p85, %p86
      %p88 = scmp.ne.s32.totalorder %s76, %s77
      %p89 = scmp.eq.s32.totalorder %s25, 1
      %p90 = por %p88, %p89
      %p92 = scmp.ne.s32.totalorder %s77, %s91
      %p93 = scmp.eq.s32.totalorder %s25, 0
      %p94 = por %p92, %p93
      %s96 = sadd.s32 %s95, 1
      %p99 = scmp.eq.s32.totalorder %s19, 1
      %p100 = scmp.ne.s32.totalorder %s95, %s97
      %p101 = scmp.eq.s32.totalorder %s19, 0
      %p102 = por %p100, %p101
      %p103 = scmp.ne.s32.totalorder %s95, %s97
      %p104 = scmp.eq.s32.totalorder %s24, 1
      %p105 = por %p103, %p104
      %p106 = scmp.ne.s32.totalorder %s97, %s98
      %p107 = scmp.eq.s32.totalorder %s24, 0
      %p108 = por %p106, %p107
      %p109 = scmp.ne.s32.totalorder %s97, %s98
      %p110 = scmp.eq.s32.totalorder %s25, 1
      %p111 = por %p109, %p110
      %p113 = scmp.ne.s32.totalorder %s98, %s112
      %p114 = scmp.eq.s32.totalorder %s25, 0
      %p115 = por %p113, %p114
      %s117 = sadd.s32 %s116, 1
      %p120 = scmp.eq.s32.totalorder %s19, 1
      %p121 = scmp.ne.s32.totalorder %s116, %s118
      %p122 = scmp.eq.s32.totalorder %s19, 0
      %p123 = por %p121, %p122
      %p124 = scmp.ne.s32.totalorder %s116, %s118
      %p125 = scmp.eq.s32.totalorder %s24, 1
      %p126 = por %p124, %p125
      %p127 = scmp.ne.s32.totalorder %s118, %s119
      %p128 = scmp.eq.s32.totalorder %s24, 0
      %p129 = por %p127, %p128
      %p130 = scmp.ne.s32.totalorder %s118, %s119
      %p131 = scmp.eq.s32.totalorder %s25, 1
      %p132 = por %p130, %p131
      %p134 = scmp.ne.s32.totalorder %s119, %s133
      %p135 = scmp.eq.s32.totalorder %s25, 0
      %p136 = por %p134, %p135
      %s137 = ssub.s32 %s19, %s26
      %p138 = scmp.eq.s32.totalorder %s137, 0
      %s140 = sadd.s32 %s139, 1
      %s141 = scalar_select %p138, %s139, %s140
      %p144 = pneg %p138
      %p145 = scmp.eq.s32.totalorder %s19, 1
      %p146 = por %p144, %p145
      %p147 = scmp.ne.s32.totalorder %s139, %s142
      %p148 = scmp.eq.s32.totalorder %s19, 0
      %p149 = por %p147, %p148
      %p150 = scmp.ne.s32.totalorder %s139, %s142
      %p151 = scmp.eq.s32.totalorder %s24, 1
      %p152 = por %p150, %p151
      %p153 = scmp.ne.s32.totalorder %s142, %s143
      %p154 = scmp.eq.s32.totalorder %s24, 0
      %p155 = por %p153, %p154
      %p156 = scmp.ne.s32.totalorder %s142, %s143
      %p157 = scmp.eq.s32.totalorder %s25, 1
      %p158 = por %p156, %p157
      %p160 = scmp.ne.s32.totalorder %s143, %s159
      %p161 = scmp.eq.s32.totalorder %s25, 0
      %p162 = por %p160, %p161
      %p163 = scmp.le.s32.totalorder 1, %s19
      %p164 = scmp.lt.s32.totalorder %s19, 3
      %p165 = pnand %p163, %p164
      %p166 = pneg %p165
      // Predicated region
      $region9: #{tpu_custom_call.1} parent=5 // pred_check
        _
      $region10: #{tpu_custom_call.1} parent=5 // pred_check_branch
        %168 = sbr.rel (%p165) target = $region12
      $region11: #{tpu_custom_call.1} parent=5 // pred_region
        %s169 = ssub.s32 %s19, 1
        // Predicated region
        $region13: #{tpu_custom_call.1} parent=11 // pred_check
          %p170 = pneg %p66
        $region14: #{tpu_custom_call.1} parent=11 // pred_check_branch
          %172 = sbr.rel (%p170) target = $region16
        $region15: #{tpu_custom_call.1} parent=11 // pred_region
          %s174 = ssub.s32 128, 128
          %175 = vsyncadd [#allocation6], %s174
          %s176 = sshll.u32 [#allocation5], 4
          %s177 = int_to_ptr.vmem [resolvable:$true] %s176
          %182 = dma.hbm_to_vmem [thread:$0]  %s1, 128, %s177, [#allocation6], 64, 64, 4
        $region16: #{tpu_custom_call.1} parent=11 // pred_fallthru
          _
        // Predicated region
        $region17: #{tpu_custom_call.1} parent=11 // pred_check
          %p183 = pneg %p87
        $region18: #{tpu_custom_call.1} parent=11 // pred_check_branch
          %185 = sbr.rel (%p183) target = $region20
        $region19: #{tpu_custom_call.1} parent=11 // pred_region
          %s187 = ssub.s32 128, 128
          %188 = vsyncadd [#allocation6], %s187
          %s189 = sshll.u32 [#allocation7], 4
          %s190 = int_to_ptr.vmem [resolvable:$true] %s189
          %195 = dma.hbm_to_vmem [thread:$0]  %s2, 128, %s190, [#allocation6], 64, 64, 4
        $region20: #{tpu_custom_call.1} parent=11 // pred_fallthru
          _
        // Predicated region
        $region21: #{tpu_custom_call.1} parent=11 // pred_check
          %p196 = pneg %p108
        $region22: #{tpu_custom_call.1} parent=11 // pred_check_branch
          %198 = sbr.rel (%p196) target = $region24
        $region23: #{tpu_custom_call.1} parent=11 // pred_region
          %s200 = ssub.s32 256, 256
          %201 = vsyncadd [#allocation9], %s200
          %s202 = sshll.u32 [#allocation8], 4
          %s203 = int_to_ptr.vmem [resolvable:$true] %s202
          %208 = dma.hbm_to_vmem [thread:$0]  %s3, 256, %s203, [#allocation9], 128, 128, 8
        $region24: #{tpu_custom_call.1} parent=11 // pred_fallthru
          _
        // Predicated region
        $region25: #{tpu_custom_call.1} parent=11 // pred_check
          %p209 = pneg %p129
        $region26: #{tpu_custom_call.1} parent=11 // pred_check_branch
          %211 = sbr.rel (%p209) target = $region28
        $region27: #{tpu_custom_call.1} parent=11 // pred_region
          _
        $region28: #{tpu_custom_call.1} parent=11 // pred_fallthru
          _
      $region12: #{tpu_custom_call.1} parent=5 // pred_fallthru
        _
      %p212 = scmp.lt.s32.totalorder %s19, 2
      // Predicated region
      $region29: #{tpu_custom_call.1} parent=5 // pred_check
        %p213 = pneg %p212
      $region30: #{tpu_custom_call.1} parent=5 // pred_check_branch
        %215 = sbr.rel (%p213) target = $region32
      $region31: #{tpu_custom_call.1} parent=5 // pred_region
        // Predicated region
        $region33: #{tpu_custom_call.1} parent=31 // pred_check
          %p216 = pneg %p39
        $region34: #{tpu_custom_call.1} parent=31 // pred_check_branch
          %218 = sbr.rel (%p216) target = $region36
        $region35: #{tpu_custom_call.1} parent=31 // pred_region
          %s219 = sand.u32 %s29, 1
          %s220 = scalar_lea.sflag [#allocation3], %s219
          %s221 = sand.u32 %s29, 1
          %s222 = smul.addr %s221, 16
          %s223 = scalar_lea.vmem [#allocation2], %s222
          %s225 = ssub.s32 256, 256
          %226 = vsyncadd %s220, %s225
          %s227 = smul.addr %s19, 4
          %s228 = smul.addr %s227, 64
          %s229 = scalar_lea.hbm %s0, %s228
          %s230 = sshll.u32 %s223, 4
          %s231 = int_to_ptr.vmem [resolvable:$true] %s230
          %236 = dma.hbm_to_vmem [thread:$0]  %s229, 256, %s231, %s220, 128, 128, 8
        $region36: #{tpu_custom_call.1} parent=31 // pred_fallthru
          _
      $region32: #{tpu_custom_call.1} parent=5 // pred_fallthru
        _
      %p237 = scmp.le.s32.totalorder 1, %s19
      %p238 = scmp.lt.s32.totalorder %s19, 3
      %p239 = pnand %p237, %p238
      %p240 = pneg %p239
      // Predicated region
      $region37: #{tpu_custom_call.1} parent=5 // pred_check
        _
      $region38: #{tpu_custom_call.1} parent=5 // pred_check_branch
        %242 = sbr.rel (%p239) target = $region40
      $region39: #{tpu_custom_call.1} parent=5 // pred_region
        %s243 = ssub.s32 %s19, 1
        %s244 = sand.u32 %s32, 1
        %s245 = scalar_lea.sflag [#allocation3], %s244
        %s246 = sand.u32 %s32, 1
        %s247 = smul.addr %s246, 16
        %s248 = scalar_lea.vmem [#allocation2], %s247
        // Predicated region
        $region41: #{tpu_custom_call.1} parent=39 // pred_check
          %p249 = pneg %p45
        $region42: #{tpu_custom_call.1} parent=39 // pred_check_branch
          %251 = sbr.rel (%p249) target = $region44
        $region43: #{tpu_custom_call.1} parent=39 // pred_region
          %252 = dma.done %s245, 256
        $region44: #{tpu_custom_call.1} parent=39 // pred_fallthru
          _
        // Predicated region
        $region45: #{tpu_custom_call.1} parent=39 // pred_check
          %p253 = pneg %p66
        $region46: #{tpu_custom_call.1} parent=39 // pred_check_branch
          %255 = sbr.rel (%p253) target = $region48
        $region47: #{tpu_custom_call.1} parent=39 // pred_region
          %256 = dma.done [#allocation6], 128
        $region48: #{tpu_custom_call.1} parent=39 // pred_fallthru
          _
        // Predicated region
        $region49: #{tpu_custom_call.1} parent=39 // pred_check
          %p257 = pneg %p87
        $region50: #{tpu_custom_call.1} parent=39 // pred_check_branch
          %259 = sbr.rel (%p257) target = $region52
        $region51: #{tpu_custom_call.1} parent=39 // pred_region
          %260 = dma.done [#allocation6], 128
        $region52: #{tpu_custom_call.1} parent=39 // pred_fallthru
          _
        // Predicated region
        $region53: #{tpu_custom_call.1} parent=39 // pred_check
          %p261 = pneg %p108
        $region54: #{tpu_custom_call.1} parent=39 // pred_check_branch
          %263 = sbr.rel (%p261) target = $region56
        $region55: #{tpu_custom_call.1} parent=39 // pred_region
          %264 = dma.done [#allocation9], 256
        $region56: #{tpu_custom_call.1} parent=39 // pred_fallthru
          _
        %s265 = sand.u32 %s32, 1
        %s266 = scalar_lea.sflag [#allocation3], %s265
        %s267 = sand.u32 %s32, 1
        %s268 = smul.addr %s267, 16
        %s269 = scalar_lea.vmem [#allocation2], %s268
        %p270 = pneg %p45
        %p271 = pneg %p42
        %p272 = pneg %p66
        %p273 = pneg %p63
        %p274 = pneg %p87
        %p275 = pneg %p84
        %p276 = pneg %p108
        %p277 = pneg %p105
        %p278 = pneg %p129
        %p279 = pneg %p126
        %p280 = pneg %p155
        %p281 = pneg %p152
        %s282 = sand.u32 %s142, 1
        %s283 = scalar_lea.sflag [#allocation4], %s282
        %s284 = sand.u32 %s142, 1
        %s285 = smul.addr %s284, 16
        %s286 = scalar_lea.vmem [#allocation10], %s285
        %v288 = vld [vmem:[#allocation5] sm:$0xf]
        %v289 = vld [vmem:[#allocation5 + $0x4] sm:$0xf]
        %v290 = vld [vmem:[#allocation7] sm:$0xf]
        %v291 = vld [vmem:[#allocation7 + $0x4] sm:$0xf]
        %v292 = vld [vmem:[#allocation8] sm:$0xff]
        %v293 = vld [vmem:[#allocation8 + $0x8] sm:$0xff]
        %v294 = vld [vmem:[%s4] sm:$0xff]
        %v295 = vld [vmem:[%s248] sm:$0xff]
        %v296 = vld [vmem:[%s248 + $0x8] sm:$0xff]
        %298 = vset.pattern.permute.xlu0 9
        %299 = vperm.xlu0 %298, %v292
        %v300 = vpop.permute.xlu0 %299
        %303 = vset.pattern.permute.xlu0 9
        %304 = vperm.xlu0 %303, %v293
        %v305 = vpop.permute.xlu0 %304
        %v309 = vunpack.c.l.b16 %v288
        %v310 = vunpack.c.l.b16 %v289
        %v311 = vpack.c.b16 %v310, %v309
        %v314 = vunpack.c.l.b16 %v295
        %v315 = vunpack.c.h.b16 %v295
        %v316 = vunpack.c.l.b16 %v296
        %v317 = vunpack.c.h.b16 %v296
        %v318 = vpack.c.b16 %v316, %v314
        %v319 = vpack.c.b16 %v317, %v315
        %vm322 = vcmask 130048
        %v324 = vsel %vm322, %v311, 0
        %326 = vmatprep.subr.bf16.mxu0 %v319
        %327 = vmatpush1.bf16.msra.mxu0 %v318
        %328 = vmatprep.subr.bf16.mxu0 0
        %329 = vmatpush1.bf16.msra.mxu0 0
        %330 = vmatprep.subr.bf16.mxu0 0
        %331 = vmatpush1.bf16.msra.mxu0 0
        %332 = vmatprep.subr.bf16.mxu0 0
        %333 = vmatpush1.bf16.msra.mxu0 0
        %334 = vmatprep.subr.bf16.mxu0 0
        %335 = vmatpush1.bf16.msra.mxu0 0
        %336 = vmatprep.subr.bf16.mxu0 0
        %337 = vmatpush1.bf16.msra.mxu0 0
        %338 = vmatprep.subr.bf16.mxu0 0
        %339 = vmatpush1.bf16.msra.mxu0 0
        %340 = vmatprep.subr.bf16.mxu0 0
        %341 = vmatpush1.bf16.msra.mxu0 0
        %342 = vmatprep.subr.bf16.mxu0 0
        %343 = vmatpush1.bf16.msra.mxu0 0
        %344 = vmatprep.subr.bf16.mxu0 0
        %345 = vmatpush1.bf16.msra.mxu0 0
        %346 = vmatprep.subr.bf16.mxu0 0
        %347 = vmatpush1.bf16.msra.mxu0 0
        %348 = vmatprep.subr.bf16.mxu0 0
        %349 = vmatpush1.bf16.msra.mxu0 0
        %350 = vmatprep.subr.bf16.mxu0 0
        %351 = vmatpush1.bf16.msra.mxu0 0
        %352 = vmatprep.subr.bf16.mxu0 0
        %353 = vmatpush1.bf16.msra.mxu0 0
        %354 = vmatprep.subr.bf16.mxu0 0
        %355 = vmatpush1.bf16.msra.mxu0 0
        %356 = vmatprep.subr.bf16.mxu0 0
        %357 = vmatpush1.bf16.msra.mxu0 0
        %358 = vmatprep.mubr.bf16.mxu0 0
        %359 = vmatmul.mubr.bf16.gmra.mrb[0].mxu0 %v324
        %v360 = vpop.f32.mrb[0].mxu0
        %v361 = vadd.f32 %v300, %v360
        %v362 = vpop.f32.mrb[0].mxu0
        %v363 = vadd.f32 %v300, %v362
        %v364 = vpop.f32.mrb[0].mxu0
        %v365 = vadd.f32 %v305, %v364
        %v366 = vpop.f32.mrb[0].mxu0
        %v367 = vadd.f32 %v305, %v366
        %368 = vdwg.mxu0
        %v369 = vmax.f32 %v361, 0.0
        %v370 = vmax.f32 %v363, 0.0
        %v371 = vmax.f32 %v365, 0.0
        %v372 = vmax.f32 %v367, 0.0
        %373 = vrot.lane.b32.xlu0 %v369, 1
        %v374 = vpop.permute.xlu0 %373
        %375 = vrot.lane.b32.xlu0 %v371, 1
        %v376 = vpop.permute.xlu0 %375
        %377 = vrot.lane.b32.xlu0 %v370, 1
        %v378 = vpop.permute.xlu0 %377
        %379 = vrot.lane.b32.xlu0 %v372, 1
        %v380 = vpop.permute.xlu0 %379
        %v381 = vlaneseq
        %v382 = vand.u32 %v381, 127
        %vm383 = vcmp.lt.s32.totalorder %v382, 1
        %v384 = vsel %vm383, %v374, %v378
        %v385 = vsel %vm383, %v376, %v380
        %v386 = vsel %vm383, %v378, %v374
        %v387 = vsel %vm383, %v380, %v376
        %v389 = vlaneseq
        %v390 = vshrl.u32 %v389, 7
        %v391 = vsub.s32 0, %v390
        %v392 = vrot.slane %v294, %v391
        %v393 = vlaneseq
        %v394 = vshrl.u32 %v393, 7
        %v395 = vsub.s32 4, %v394
        %v396 = vrot.slane %v294, %v395
        %v399 = vlaneseq
        %v400 = vshrl.u32 %v399, 7
        %v401 = vsub.s32 0, %v400
        %v402 = vrot.slane %v392, %v401
        %v403 = vlaneseq
        %v404 = vshrl.u32 %v403, 7
        %v405 = vsub.s32 0, %v404
        %v406 = vrot.slane %v396, %v405
        %v407 = vmul.f32 %v402, %v386
        %v408 = vmul.f32 %v406, %v384
        %v409 = vmul.f32 %v402, %v387
        %v410 = vmul.f32 %v406, %v385
        %411 = vrot.lane.b32.xlu0 %v369, 127
        %v412 = vpop.permute.xlu0 %411
        %413 = vrot.lane.b32.xlu0 %v371, 127
        %v414 = vpop.permute.xlu0 %413
        %415 = vrot.lane.b32.xlu0 %v370, 127
        %v416 = vpop.permute.xlu0 %415
        %417 = vrot.lane.b32.xlu0 %v372, 127
        %v418 = vpop.permute.xlu0 %417
        %vm419 = vcmp.lt.s32.totalorder %v382, 127
        %v420 = vsel %vm419, %v412, %v416
        %v421 = vsel %vm419, %v414, %v418
        %v422 = vsel %vm419, %v416, %v412
        %v423 = vsel %vm419, %v418, %v414
        %v424 = vlaneseq
        %v425 = vshrl.u32 %v424, 7
        %v426 = vsub.s32 1, %v425
        %v427 = vrot.slane %v294, %v426
        %v428 = vlaneseq
        %v429 = vshrl.u32 %v428, 7
        %v430 = vsub.s32 5, %v429
        %v431 = vrot.slane %v294, %v430
        %v434 = vlaneseq
        %v435 = vshrl.u32 %v434, 7
        %v436 = vsub.s32 1, %v435
        %v437 = vrot.slane %v427, %v436
        %v438 = vlaneseq
        %v439 = vshrl.u32 %v438, 7
        %v440 = vsub.s32 1, %v439
        %v441 = vrot.slane %v431, %v440
        %v442 = vmul.f32 %v437, %v420
        %v443 = vmul.f32 %v441, %v422
        %v444 = vmul.f32 %v437, %v421
        %v445 = vmul.f32 %v441, %v423
        %446 = vset.pattern.permute.xlu0 3
        %447 = vperm.xlu0 %446, %v292
        %v448 = vpop.permute.xlu0 %447
        %450 = vset.pattern.permute.xlu0 3
        %451 = vperm.xlu0 %450, %v293
        %v452 = vpop.permute.xlu0 %451
        %v454 = vmul.f32 %v448, %v407
        %v455 = vmul.f32 %v448, %v408
        %v456 = vmul.f32 %v452, %v409
        %v457 = vmul.f32 %v452, %v410
        %458 = vset.pattern.permute.xlu0 4
        %459 = vperm.xlu0 %458, %v292
        %v460 = vpop.permute.xlu0 %459
        %462 = vset.pattern.permute.xlu0 4
        %463 = vperm.xlu0 %462, %v293
        %v464 = vpop.permute.xlu0 %463
        %v466 = vmul.f32 %v460, %v369
        %v467 = vmul.f32 %v460, %v370
        %v468 = vmul.f32 %v464, %v371
        %v469 = vmul.f32 %v464, %v372
        %v470 = vadd.f32 %v454, %v466
        %v471 = vadd.f32 %v455, %v467
        %v472 = vadd.f32 %v456, %v468
        %v473 = vadd.f32 %v457, %v469
        %474 = vset.pattern.permute.xlu0 5
        %475 = vperm.xlu0 %474, %v292
        %v476 = vpop.permute.xlu0 %475
        %478 = vset.pattern.permute.xlu0 5
        %479 = vperm.xlu0 %478, %v293
        %v480 = vpop.permute.xlu0 %479
        %v482 = vmul.f32 %v476, %v442
        %v483 = vmul.f32 %v476, %v443
        %v484 = vmul.f32 %v480, %v444
        %v485 = vmul.f32 %v480, %v445
        %v486 = vadd.f32 %v470, %v482
        %v487 = vadd.f32 %v471, %v483
        %v488 = vadd.f32 %v472, %v484
        %v489 = vadd.f32 %v473, %v485
        %490 = vset.pattern.permute.xlu0 0
        %491 = vperm.xlu0 %490, %v292
        %v492 = vpop.permute.xlu0 %491
        %494 = vset.pattern.permute.xlu0 0
        %495 = vperm.xlu0 %494, %v293
        %v496 = vpop.permute.xlu0 %495
        %v498 = vmul.f32 %v492, %v407
        %v499 = vmul.f32 %v492, %v408
        %v500 = vmul.f32 %v496, %v409
        %v501 = vmul.f32 %v496, %v410
        %502 = vset.pattern.permute.xlu0 1
        %503 = vperm.xlu0 %502, %v292
        %v504 = vpop.permute.xlu0 %503
        %506 = vset.pattern.permute.xlu0 1
        %507 = vperm.xlu0 %506, %v293
        %v508 = vpop.permute.xlu0 %507
        %v510 = vmul.f32 %v504, %v369
        %v511 = vmul.f32 %v504, %v370
        %v512 = vmul.f32 %v508, %v371
        %v513 = vmul.f32 %v508, %v372
        %v514 = vadd.f32 %v498, %v510
        %v515 = vadd.f32 %v499, %v511
        %v516 = vadd.f32 %v500, %v512
        %v517 = vadd.f32 %v501, %v513
        %518 = vset.pattern.permute.xlu0 2
        %519 = vperm.xlu0 %518, %v292
        %v520 = vpop.permute.xlu0 %519
        %522 = vset.pattern.permute.xlu0 2
        %523 = vperm.xlu0 %522, %v293
        %v524 = vpop.permute.xlu0 %523
        %v526 = vmul.f32 %v520, %v442
        %v527 = vmul.f32 %v520, %v443
        %v528 = vmul.f32 %v524, %v444
        %v529 = vmul.f32 %v524, %v445
        %v530 = vadd.f32 %v514, %v526
        %v531 = vadd.f32 %v515, %v527
        %v532 = vadd.f32 %v516, %v528
        %v533 = vadd.f32 %v517, %v529
        %534 = vrot.lane.b32.xlu0 %v530, 16
        %v535 = vpop.permute.xlu0 %534
        %536 = vrot.lane.b32.xlu0 %v532, 16
        %v537 = vpop.permute.xlu0 %536
        %538 = vrot.lane.b32.xlu0 %v531, 16
        %v539 = vpop.permute.xlu0 %538
        %540 = vrot.lane.b32.xlu0 %v533, 16
        %v541 = vpop.permute.xlu0 %540
        %vm542 = vcmp.lt.s32.totalorder %v382, 16
        %v543 = vsel %vm542, %v535, %v539
        %v544 = vsel %vm542, %v537, %v541
        %v545 = vsel %vm542, %v539, %v535
        %v546 = vsel %vm542, %v541, %v537
        %v547 = vlaneseq
        %v548 = vshrl.u32 %v547, 7
        %v549 = vsub.s32 2, %v548
        %v550 = vrot.slane %v294, %v549
        %v551 = vlaneseq
        %v552 = vshrl.u32 %v551, 7
        %v553 = vsub.s32 6, %v552
        %v554 = vrot.slane %v294, %v553
        %v557 = vlaneseq
        %v558 = vshrl.u32 %v557, 7
        %v559 = vsub.s32 2, %v558
        %v560 = vrot.slane %v550, %v559
        %v561 = vlaneseq
        %v562 = vshrl.u32 %v561, 7
        %v563 = vsub.s32 2, %v562
        %v564 = vrot.slane %v554, %v563
        %v565 = vmul.f32 %v560, %v545
        %v566 = vmul.f32 %v564, %v543
        %v567 = vmul.f32 %v560, %v546
        %v568 = vmul.f32 %v564, %v544
        %v569 = vadd.f32 %v486, %v565
        %v570 = vadd.f32 %v487, %v566
        %v571 = vadd.f32 %v488, %v567
        %v572 = vadd.f32 %v489, %v568
        %573 = vset.pattern.permute.xlu0 6
        %574 = vperm.xlu0 %573, %v292
        %v575 = vpop.permute.xlu0 %574
        %577 = vset.pattern.permute.xlu0 6
        %578 = vperm.xlu0 %577, %v293
        %v579 = vpop.permute.xlu0 %578
        %v581 = vmul.f32 %v575, %v407
        %v582 = vmul.f32 %v575, %v408
        %v583 = vmul.f32 %v579, %v409
        %v584 = vmul.f32 %v579, %v410
        %585 = vset.pattern.permute.xlu0 7
        %586 = vperm.xlu0 %585, %v292
        %v587 = vpop.permute.xlu0 %586
        %589 = vset.pattern.permute.xlu0 7
        %590 = vperm.xlu0 %589, %v293
        %v591 = vpop.permute.xlu0 %590
        %v593 = vmul.f32 %v587, %v369
        %v594 = vmul.f32 %v587, %v370
        %v595 = vmul.f32 %v591, %v371
        %v596 = vmul.f32 %v591, %v372
        %v597 = vadd.f32 %v581, %v593
        %v598 = vadd.f32 %v582, %v594
        %v599 = vadd.f32 %v583, %v595
        %v600 = vadd.f32 %v584, %v596
        %601 = vset.pattern.permute.xlu0 8
        %602 = vperm.xlu0 %601, %v292
        %v603 = vpop.permute.xlu0 %602
        %605 = vset.pattern.permute.xlu0 8
        %606 = vperm.xlu0 %605, %v293
        %v607 = vpop.permute.xlu0 %606
        %v609 = vmul.f32 %v603, %v442
        %v610 = vmul.f32 %v603, %v443
        %v611 = vmul.f32 %v607, %v444
        %v612 = vmul.f32 %v607, %v445
        %v613 = vadd.f32 %v597, %v609
        %v614 = vadd.f32 %v598, %v610
        %v615 = vadd.f32 %v599, %v611
        %v616 = vadd.f32 %v600, %v612
        %617 = vrot.lane.b32.xlu0 %v613, 112
        %v618 = vpop.permute.xlu0 %617
        %619 = vrot.lane.b32.xlu0 %v615, 112
        %v620 = vpop.permute.xlu0 %619
        %621 = vrot.lane.b32.xlu0 %v614, 112
        %v622 = vpop.permute.xlu0 %621
        %623 = vrot.lane.b32.xlu0 %v616, 112
        %v624 = vpop.permute.xlu0 %623
        %vm625 = vcmp.lt.s32.totalorder %v382, 112
        %v626 = vsel %vm625, %v618, %v622
        %v627 = vsel %vm625, %v620, %v624
        %v628 = vsel %vm625, %v622, %v618
        %v629 = vsel %vm625, %v624, %v620
        %v630 = vlaneseq
        %v631 = vshrl.u32 %v630, 7
        %v632 = vsub.s32 3, %v631
        %v633 = vrot.slane %v294, %v632
        %v634 = vlaneseq
        %v635 = vshrl.u32 %v634, 7
        %v636 = vsub.s32 7, %v635
        %v637 = vrot.slane %v294, %v636
        %v640 = vlaneseq
        %v641 = vshrl.u32 %v640, 7
        %v642 = vsub.s32 3, %v641
        %v643 = vrot.slane %v633, %v642
        %v644 = vlaneseq
        %v645 = vshrl.u32 %v644, 7
        %v646 = vsub.s32 3, %v645
        %v647 = vrot.slane %v637, %v646
        %v648 = vmul.f32 %v643, %v626
        %v649 = vmul.f32 %v647, %v628
        %v650 = vmul.f32 %v643, %v627
        %v651 = vmul.f32 %v647, %v629
        %v652 = vadd.f32 %v569, %v648
        %v653 = vadd.f32 %v570, %v649
        %v654 = vadd.f32 %v571, %v650
        %v655 = vadd.f32 %v572, %v651
        %656 = vset.pattern.permute.xlu0 10
        %657 = vperm.xlu0 %656, %v292
        %v658 = vpop.permute.xlu0 %657
        %660 = vset.pattern.permute.xlu0 10
        %661 = vperm.xlu0 %660, %v293
        %v662 = vpop.permute.xlu0 %661
        %v664 = vadd.f32 %v652, %v658
        %v665 = vadd.f32 %v653, %v658
        %v666 = vadd.f32 %v654, %v662
        %v667 = vadd.f32 %v655, %v662
        %v668 = vmax.f32 %v664, 0.0
        %v669 = vmax.f32 %v665, 0.0
        %v670 = vmax.f32 %v666, 0.0
        %v671 = vmax.f32 %v667, 0.0
        %v672 = vpack.c.bf16 %v670, %v668
        %v673 = vpack.c.bf16 %v671, %v669
        %674 = vset.pattern.permute.xlu0 11
        %675 = vperm.xlu0 %674, %v292
        %v676 = vpop.permute.xlu0 %675
        %678 = vset.pattern.permute.xlu0 11
        %679 = vperm.xlu0 %678, %v293
        %v680 = vpop.permute.xlu0 %679
        %v684 = vunpack.c.l.b16 %v290
        %v685 = vunpack.c.l.b16 %v291
        %v686 = vpack.c.b16 %v685, %v684
        %v688 = vsel %vm322, %v686, 0
        %690 = vmatprep.subr.bf16.mxu0 %v673
        %691 = vmatpush1.bf16.msra.mxu0 %v672
        %692 = vmatprep.subr.bf16.mxu0 0
        %693 = vmatpush1.bf16.msra.mxu0 0
        %694 = vmatprep.subr.bf16.mxu0 0
        %695 = vmatpush1.bf16.msra.mxu0 0
        %696 = vmatprep.subr.bf16.mxu0 0
        %697 = vmatpush1.bf16.msra.mxu0 0
        %698 = vmatprep.subr.bf16.mxu0 0
        %699 = vmatpush1.bf16.msra.mxu0 0
        %700 = vmatprep.subr.bf16.mxu0 0
        %701 = vmatpush1.bf16.msra.mxu0 0
        %702 = vmatprep.subr.bf16.mxu0 0
        %703 = vmatpush1.bf16.msra.mxu0 0
        %704 = vmatprep.subr.bf16.mxu0 0
        %705 = vmatpush1.bf16.msra.mxu0 0
        %706 = vmatprep.subr.bf16.mxu0 0
        %707 = vmatpush1.bf16.msra.mxu0 0
        %708 = vmatprep.subr.bf16.mxu0 0
        %709 = vmatpush1.bf16.msra.mxu0 0
        %710 = vmatprep.subr.bf16.mxu0 0
        %711 = vmatpush1.bf16.msra.mxu0 0
        %712 = vmatprep.subr.bf16.mxu0 0
        %713 = vmatpush1.bf16.msra.mxu0 0
        %714 = vmatprep.subr.bf16.mxu0 0
        %715 = vmatpush1.bf16.msra.mxu0 0
        %716 = vmatprep.subr.bf16.mxu0 0
        %717 = vmatpush1.bf16.msra.mxu0 0
        %718 = vmatprep.subr.bf16.mxu0 0
        %719 = vmatpush1.bf16.msra.mxu0 0
        %720 = vmatprep.subr.bf16.mxu0 0
        %721 = vmatpush1.bf16.msra.mxu0 0
        %722 = vmatprep.mubr.bf16.mxu0 0
        %723 = vmatmul.mubr.bf16.gmra.mrb[0].mxu0 %v688
        %v724 = vpop.f32.mrb[0].mxu0
        %v725 = vadd.f32 %v676, %v724
        %v726 = vpop.f32.mrb[0].mxu0
        %v727 = vadd.f32 %v676, %v726
        %v728 = vpop.f32.mrb[0].mxu0
        %v729 = vadd.f32 %v680, %v728
        %v730 = vpop.f32.mrb[0].mxu0
        %v731 = vadd.f32 %v680, %v730
        %732 = vdwg.mxu0
        %v733 = vunpack.c.l.bf16 %v295
        %v734 = vunpack.c.h.bf16 %v295
        %v735 = vunpack.c.l.bf16 %v296
        %v736 = vunpack.c.h.bf16 %v296
        %v737 = vadd.f32 %v725, %v733
        %v738 = vadd.f32 %v727, %v734
        %v739 = vadd.f32 %v729, %v735
        %v740 = vadd.f32 %v731, %v736
        %v741 = vmax.f32 %v737, 0.0
        %v742 = vmax.f32 %v738, 0.0
        %v743 = vmax.f32 %v739, 0.0
        %v744 = vmax.f32 %v740, 0.0
        %v745 = vpack.c.bf16 %v743, %v741
        %v746 = vpack.c.bf16 %v744, %v742
        %v749 = vunpack.c.l.b16 %v745
        %v750 = vunpack.c.l.b16 %v746
        %v751 = vunpack.c.h.b16 %v745
        %v752 = vunpack.c.h.b16 %v746
        %v753 = vpack.c.b16 %v750, %v749
        %v754 = vpack.c.b16 %v752, %v751
        %757 = vst [vmem:[%s286] sm:$0xff] %v753
        %758 = vst [vmem:[%s286 + $0x8] sm:$0xff] %v754
        %s759 = sand.u32 %s142, 1
        %s760 = scalar_lea.sflag [#allocation4], %s759
        %s761 = sand.u32 %s142, 1
        %s762 = smul.addr %s761, 16
        %s763 = scalar_lea.vmem [#allocation10], %s762
        // Predicated region
        $region57: #{tpu_custom_call.1} parent=39 // pred_check
          %p764 = pneg %p152
        $region58: #{tpu_custom_call.1} parent=39 // pred_check_branch
          %766 = sbr.rel (%p764) target = $region60
        $region59: #{tpu_custom_call.1} parent=39 // pred_region
          %s768 = ssub.s32 256, 256
          %769 = vsyncadd %s760, %s768
          %s770 = smul.addr %s24, 4
          %s771 = smul.addr %s770, 64
          %s772 = scalar_lea.hbm %s5, %s771
          %s773 = sshll.u32 %s763, 4
          %s774 = int_to_ptr.vmem [resolvable:$true] %s773
          %779 = dma.vmem_to_hbm [thread:$0]  %s774, 256, %s772, %s760, 128, 128, 8
        $region60: #{tpu_custom_call.1} parent=39 // pred_fallthru
          _
      $region40: #{tpu_custom_call.1} parent=5 // pred_fallthru
        _
      %p780 = scmp.le.s32.totalorder 2, %s19
      // Predicated region
      $region61: #{tpu_custom_call.1} parent=5 // pred_check
        %p781 = pneg %p780
      $region62: #{tpu_custom_call.1} parent=5 // pred_check_branch
        %783 = sbr.rel (%p781) target = $region64
      $region63: #{tpu_custom_call.1} parent=5 // pred_region
        %s784 = ssub.s32 %s19, 2
        // Predicated region
        $region65: #{tpu_custom_call.1} parent=63 // pred_check
          %p785 = pneg %p158
        $region66: #{tpu_custom_call.1} parent=63 // pred_check_branch
          %787 = sbr.rel (%p785) target = $region68
        $region67: #{tpu_custom_call.1} parent=63 // pred_region
          %s788 = sand.u32 %s143, 1
          %s789 = scalar_lea.sflag [#allocation4], %s788
          %s790 = sand.u32 %s143, 1
          %s791 = smul.addr %s790, 16
          %s792 = scalar_lea.vmem [#allocation10], %s791
          %793 = dma.done %s789, 256
        $region68: #{tpu_custom_call.1} parent=63 // pred_fallthru
          _
      $region64: #{tpu_custom_call.1} parent=5 // pred_fallthru
        _
    $region6: #{tpu_custom_call.1} parent=1 // loop_footer
      %s23 = sadd.s32 1, %s19
    $region7: #{tpu_custom_call.1} parent=1 // loop_footer_branch
      %18 = sbr.rel target = $region3
    $region8: #{tpu_custom_call.1} parent=1 // loop_exit
      _
    %794 = vsyncpa [#allocation3], 1
    %s795 = scalar_lea.sflag [#allocation3], 1
    %796 = vsyncpa %s795, 1
    %797 = vsyncpa [#allocation6], 1
    %798 = vsyncpa [#allocation9], 1
    %799 = vsyncpa [#allocation4], 1
    %s800 = scalar_lea.sflag [#allocation4], 1
    %801 = vsyncpa %s800, 1

</llo_original>
